<compile_context>
chip_gen: v7x
topology: tpu7x:2x2x1
jax: 0.10.0
libtpu: 0.0.40
codegen_flags: <defaults>
</compile_context>

<pallas_src>
import functools

import numpy as np
import jax
import jax.numpy as jnp
from jax import lax
from jax.experimental import pallas as pl
from jax.experimental.pallas import tpu as pltpu


# ----------------------------------------------------------------------------
# Fused DownBlock kernel (NB batch elements per grid step)
# ----------------------------------------------------------------------------
def _down_block_kernel(ph_ref, dw1_ref, dw2_ref, w21_ref, b21_ref,
                       wfin_ref, bfin_ref, o_ref,
                       *, NB, P, Pp, Ho, Wo, Cin, Cch):
  """Whole DownBlock for NB batch elements (channel-last layout).

  ph_ref : (NB, 4, P, Pp, Cin)  parity phases of the zero-padded NHWC input,
                                 phase index = 2*(row parity) + (col parity).
  dw1/dw2: (10, C)              rows 0..8 = 3x3 depthwise taps * BN scale,
                                 row 9 = BN bias.
  w21    : (Cin, Cch)           conv21 1x1 weight * BN scale.
  b21    : (4*P*Pp, Cch)        conv21 BN bias per (phase, padded position),
                                 zeroed on the pad ring (== conv22 zero pad).
  wfin   : (Cin+Cch, 2*Cch)     merged conv12||conv23 weight * BN scale with
                                 channel_shuffle(g=2) folded into even/odd
                                 output columns.
  bfin   : (1, 2*Cch)           merged BN bias (even=conv12, odd=conv23).
  o_ref  : (NB, Ho, Wo, 2*Cch)  shuffled NHWC output block.
  """
  C2 = 2 * Cch
  M2 = NB * 4 * P * Pp

  x = ph_ref[...]                                          # (NB, 4, P, Pp, Cin)

  # ---- branch 2, conv21 (1x1) + BN + ReLU: ONE matmul over batch x phases
  #      x padded-spatial rows; channel-only contraction (no kron zeros) ----
  z = jnp.dot(x.reshape(M2, Cin), w21_ref[...],
              preferred_element_type=jnp.float32)          # (M2, Cch)
  z = z.reshape(NB, 4 * P * Pp, Cch) + b21_ref[...].reshape(1, 4 * P * Pp, Cch)
  z = jnp.maximum(z, 0.0).reshape(NB, 4, P, Pp, Cch)

  # ---- depthwise 3x3 stride-2 conv (+ folded BN) via parity-phase taps:
  #      every tap is a contiguous slice, column offset on the sublane axis --
  def dwconv_s2(xph, w_pack, C):
    w = w_pack[...]                                        # (10, C)
    acc = None
    for ki in range(3):
      for kj in range(3):
        tap = xph[:, (ki % 2) * 2 + (kj % 2),
                  ki // 2:ki // 2 + Ho,
                  kj // 2:kj // 2 + Wo, :]                 # (NB, Ho, Wo, C)
        t = tap * w[ki * 3 + kj:ki * 3 + kj + 1, :].reshape(1, 1, 1, C)
        acc = t if acc is None else acc + t
    return acc + w[9:10, :].reshape(1, 1, 1, C)            # + BN bias

  y1 = dwconv_s2(x, dw1_ref, Cin)                          # (NB, Ho, Wo, Cin)
  y2 = dwconv_s2(z, dw2_ref, Cch)                          # (NB, Ho, Wo, Cch)

  # ---- merged final 1x1s (conv12 | conv23) + BN + ReLU; channel shuffle
  #      folded into interleaved output columns -----------------------------
  y = jnp.concatenate([y1, y2], axis=-1)                   # (NB, Ho, Wo, Cin+Cch)
  o = jnp.dot(y.reshape(NB * Ho * Wo, Cin + Cch), wfin_ref[...],
              preferred_element_type=jnp.float32)          # (NB*Ho*Wo, C2)
  o = jnp.maximum(o + bfin_ref[...], 0.0)
  o_ref[...] = o.reshape(NB, Ho, Wo, C2).astype(o_ref.dtype)


# ----------------------------------------------------------------------------
# Parameter folding / packing (tiny XLA work, 6 constant slabs total)
# ----------------------------------------------------------------------------
def _prepare(p, Cin, Cch, P, Pp):
  f32 = jnp.float32
  C2 = 2 * Cch

  # depthwise packs: rows 0..8 = per-tap weight * BN scale, row 9 = BN bias
  dw1 = jnp.concatenate(
      [p["dw11_w"].astype(f32).reshape(9, Cin) * p["dw11_s"].astype(f32)[None, :],
       p["dw11_b"].astype(f32).reshape(1, Cin)], axis=0)             # (10, Cin)
  dw2 = jnp.concatenate(
      [p["dw22_w"].astype(f32).reshape(9, Cch) * p["dw22_s"].astype(f32)[None, :],
       p["dw22_b"].astype(f32).reshape(1, Cch)], axis=0)             # (10, Cch)

  # conv21 (1x1) weight with BN scale folded in
  w21 = p["pw21_w"].astype(f32) * p["pw21_s"].astype(f32)[None, :]   # (Cin, Cch)

  # conv21 BN bias per (phase, padded position): zero on the pad ring so the
  # ReLU output reproduces conv22's zero padding exactly (the matmul result
  # is already 0 there because the padded input is 0).
  b21v = p["pw21_b"].astype(f32)
  rows = []
  for pi in (0, 1):
    for pj in (0, 1):
      m = jnp.zeros((P, Pp), f32).at[:, :P].set(1.0)
      m = m.at[0 if pi == 0 else P - 1, :].set(0.0)
      m = m.at[:, 0 if pj == 0 else P - 1].set(0.0)
      rows.append(m.reshape(P * Pp, 1) * b21v[None, :])
  b21 = jnp.concatenate(rows, axis=0)                                # (4*P*Pp, Cch)

  # merged final 1x1 (conv12 || conv23): channel_shuffle(g=2) folded into
  # interleaved output columns (even <- branch 1, odd <- branch 2), BN scale
  # folded into the columns, BN bias packed separately.
  wfin = jnp.zeros((Cin + Cch, C2), f32)
  wfin = wfin.at[:Cin, 0::2].set(
      p["pw12_w"].astype(f32) * p["pw12_s"].astype(f32)[None, :])
  wfin = wfin.at[Cin:, 1::2].set(
      p["pw23_w"].astype(f32) * p["pw23_s"].astype(f32)[None, :])
  bfin = jnp.zeros((1, C2), f32)
  bfin = bfin.at[0, 0::2].set(p["pw12_b"].astype(f32))
  bfin = bfin.at[0, 1::2].set(p["pw23_b"].astype(f32))

  return [dw1, dw2, w21, b21, wfin, bfin]


def _pick_block_batch(n, max_nb=8):
  """Largest batch block <= max_nb dividing n while keeping >= 2 grid steps
  (v7x has 2 TensorCores; a size-1 grid would idle one of them)."""
  best = 1
  for nb in range(1, min(n, max_nb) + 1):
    if n % nb == 0 and (n // nb >= 2 or n == 1):
      best = nb
  return best


# ----------------------------------------------------------------------------
# DownBlock forward (single fused pallas_call)
# ----------------------------------------------------------------------------
@jax.jit
def down_block(x_nchw, p):
  N, Cin, H, W = x_nchw.shape
  assert H % 2 == 0 and W % 2 == 0, "DownBlock expects even spatial dims"
  Cch = p["pw12_w"].shape[1]
  C2 = 2 * Cch
  Ho, Wo = H // 2, W // 2
  P = Ho + 1                        # phase extent of the zero-padded input
  Pp = ((P + 7) // 8) * 8           # column-phase extent, sublane-aligned
  NB = _pick_block_batch(N)
  G = N // NB

  # minimal XLA glue: one pad + (free reshape) + one transpose -> phase-major
  # channel-last layout (N, 4, P, Pp, Cin); extra right/bottom zero columns
  # from the sublane alignment are never read by the depthwise taps.
  xp = jnp.pad(x_nchw.astype(jnp.float32),
               ((0, 0), (0, 0), (1, 1), (1, 1 + 2 * (Pp - P))))
  xp = xp.reshape(N, Cin, P, 2, Pp, 2)
  phases = jnp.transpose(xp, (0, 3, 5, 2, 4, 1)).reshape(N, 4, P, Pp, Cin)

  consts = _prepare(p, Cin, Cch, P, Pp)

  kernel = functools.partial(_down_block_kernel, NB=NB, P=P, Pp=Pp,
                             Ho=Ho, Wo=Wo, Cin=Cin, Cch=Cch)

  def const_spec(a):                # whole (tiny) slab, resident across steps
    nd = a.ndim
    return pl.BlockSpec(a.shape, lambda n: (0,) * nd)

  out_nhwc = pl.pallas_call(
      kernel,
      out_shape=jax.ShapeDtypeStruct((N, Ho, Wo, C2), x_nchw.dtype),
      grid=(G,),
      in_specs=[pl.BlockSpec((NB, 4, P, Pp, Cin), lambda n: (n, 0, 0, 0, 0))]
               + [const_spec(a) for a in consts],
      out_specs=pl.BlockSpec((NB, Ho, Wo, C2), lambda n: (n, 0, 0, 0)),
      compiler_params=pltpu.CompilerParams(dimension_semantics=("parallel",)),
  )(phases, *consts)

  return jnp.transpose(out_nhwc, (0, 3, 1, 2))            # NHWC -> NCHW


# ----------------------------------------------------------------------------
# Pure-JAX reference (for correctness check)
# ----------------------------------------------------------------------------
def ref_down_block(x, p):
  hp = lax.Precision.HIGHEST

  def bn(y, s, b):
    return y * s[None, :, None, None] + b[None, :, None, None]

  def dwconv(y, w33c):
    C = y.shape[1]
    w = jnp.transpose(w33c, (2, 0, 1))[:, None, :, :]       # (C,1,3,3)
    return lax.conv_general_dilated(
        y, w, (2, 2), ((1, 1), (1, 1)), feature_group_count=C,
        dimension_numbers=("NCHW", "OIHW", "NCHW"), precision=hp)

  def pwconv(y, w):                                          # w (Cin, Cout)
    return jnp.einsum("nchw,cd->ndhw", y, w, precision=hp)

  x1 = bn(dwconv(x, p["dw11_w"]), p["dw11_s"], p["dw11_b"])
  x1 = jnp.maximum(bn(pwconv(x1, p["pw12_w"]), p["pw12_s"], p["pw12_b"]), 0.0)
  x2 = jnp.maximum(bn(pwconv(x, p["pw21_w"]), p["pw21_s"], p["pw21_b"]), 0.0)
  x2 = bn(dwconv(x2, p["dw22_w"]), p["dw22_s"], p["dw22_b"])
  x2 = jnp.maximum(bn(pwconv(x2, p["pw23_w"]), p["pw23_s"], p["pw23_b"]), 0.0)
  cat = jnp.concatenate([x1, x2], axis=1)
  n, c, h, w = cat.shape
  return cat.reshape(n, 2, c // 2, h, w).transpose(0, 2, 1, 3, 4).reshape(n, c, h, w)


# ----------------------------------------------------------------------------
# Deterministic parameter init (folded inference-mode BatchNorm)
# ----------------------------------------------------------------------------
def make_params(key, in_channels, out_channels):
  channels = out_channels // 2
  ks = jax.random.split(key, 10)

  def bn_fold(k, c):
    k1, k2, k3, k4 = jax.random.split(k, 4)
    gamma = 1.0 + 0.1 * jax.random.normal(k1, (c,), jnp.float32)
    beta = 0.1 * jax.random.normal(k2, (c,), jnp.float32)
    mean = 0.1 * jax.random.normal(k3, (c,), jnp.float32)
    var = 1.0 + 0.1 * jnp.abs(jax.random.normal(k4, (c,), jnp.float32))
    scale = gamma * lax.rsqrt(var + 1e-5)
    return scale, beta - mean * scale

  p = {}
  p["dw11_w"] = 0.2 * jax.random.normal(ks[0], (3, 3, in_channels), jnp.float32)
  p["dw11_s"], p["dw11_b"] = bn_fold(ks[1], in_channels)
  p["pw12_w"] = 0.2 * jax.random.normal(ks[2], (in_channels, channels), jnp.float32)
  p["pw12_s"], p["pw12_b"] = bn_fold(ks[3], channels)
  p["pw21_w"] = 0.2 * jax.random.normal(ks[4], (in_channels, channels), jnp.float32)
  p["pw21_s"], p["pw21_b"] = bn_fold(ks[5], channels)
  p["dw22_w"] = 0.2 * jax.random.normal(ks[6], (3, 3, channels), jnp.float32)
  p["dw22_s"], p["dw22_b"] = bn_fold(ks[7], channels)
  p["pw23_w"] = 0.2 * jax.random.normal(ks[8], (channels, channels), jnp.float32)
  p["pw23_s"], p["pw23_b"] = bn_fold(ks[9], channels)
  return p


if __name__ == "__main__":
  in_channels, out_channels = 8, 16
  N, H, W = 2, 16, 16

  key = jax.random.PRNGKey(0)
  k_x, k_p = jax.random.split(key)
  x = jax.random.normal(k_x, (N, in_channels, H, W), jnp.float32)
  params = make_params(k_p, in_channels, out_channels)

  out = jax.block_until_ready(down_block(x, params))
  ref = ref_down_block(x, params)

  assert out.shape == (N, out_channels, H // 2, W // 2), out.shape
  np.testing.assert_allclose(np.asarray(out), np.asarray(ref), rtol=1e-3, atol=1e-3)

  print("KERNEL_OK")
</pallas_src>

<mosaic_0001>
module attributes {stable_mosaic.version = 11 : i64} {
  func.func @_down_block_kernel(%arg0: i32, %arg1: memref<1x4x9x16x8xf32, #tpu.memory_space<vmem>>, %arg2: memref<10x8xf32, #tpu.memory_space<vmem>>, %arg3: memref<10x8xf32, #tpu.memory_space<vmem>>, %arg4: memref<8x8xf32, #tpu.memory_space<vmem>>, %arg5: memref<576x8xf32, #tpu.memory_space<vmem>>, %arg6: memref<16x16xf32, #tpu.memory_space<vmem>>, %arg7: memref<1x16xf32, #tpu.memory_space<vmem>>, %arg8: memref<1x8x8x16xf32, #tpu.memory_space<vmem>>) attributes {dimension_semantics = [#tpu.dimension_semantics<parallel>], iteration_bounds = array<i64: 2>, scalar_prefetch = 0 : i64, scratch_operands = 0 : i64, tpu.core_type = #tpu.core_type<tc>, window_params = [{transform_indices = @transform_0, window_bounds = array<i64: 1, 4, 9, 16, 8>}, {pipeline_mode = #tpu.pipeline_mode<synchronous>, transform_indices = @transform_1, window_bounds = array<i64: 10, 8>}, {pipeline_mode = #tpu.pipeline_mode<synchronous>, transform_indices = @transform_2, window_bounds = array<i64: 10, 8>}, {pipeline_mode = #tpu.pipeline_mode<synchronous>, transform_indices = @transform_3, window_bounds = array<i64: 8, 8>}, {pipeline_mode = #tpu.pipeline_mode<synchronous>, transform_indices = @transform_4, window_bounds = array<i64: 576, 8>}, {pipeline_mode = #tpu.pipeline_mode<synchronous>, transform_indices = @transform_5, window_bounds = array<i64: 16, 16>}, {pipeline_mode = #tpu.pipeline_mode<synchronous>, transform_indices = @transform_6, window_bounds = array<i64: 1, 16>}, {transform_indices = @transform_7, window_bounds = array<i64: 1, 8, 8, 16>}]} {
    %c0 = arith.constant 0 : index
    %c0_0 = arith.constant 0 : index
    %c0_1 = arith.constant 0 : index
    %c0_2 = arith.constant 0 : index
    %c0_3 = arith.constant 0 : index
    %0 = vector.load %arg1[%c0, %c0_0, %c0_1, %c0_2, %c0_3] : memref<1x4x9x16x8xf32, #tpu.memory_space<vmem>>, vector<1x4x9x16x8xf32>
    %1 = vector.shape_cast %0 : vector<1x4x9x16x8xf32> to vector<576x8xf32>
    %c0_4 = arith.constant 0 : index
    %c0_5 = arith.constant 0 : index
    %2 = vector.load %arg4[%c0_4, %c0_5] : memref<8x8xf32, #tpu.memory_space<vmem>>, vector<8x8xf32>
    %cst = arith.constant dense<0.000000e+00> : vector<576x8xf32>
    %3 = tpu.matmul %1, %2, %cst {dimension_numbers = #tpu.dot_dimension_numbers<[1], [0], [0], [1], [0, 0, 1, 1], [], []>} : vector<576x8xf32>, vector<8x8xf32>, vector<576x8xf32> -> vector<576x8xf32>
    %4 = vector.shape_cast %3 : vector<576x8xf32> to vector<1x576x8xf32>
    %c0_6 = arith.constant 0 : index
    %c0_7 = arith.constant 0 : index
    %5 = vector.load %arg5[%c0_6, %c0_7] : memref<576x8xf32, #tpu.memory_space<vmem>>, vector<576x8xf32>
    %6 = vector.shape_cast %5 : vector<576x8xf32> to vector<1x576x8xf32>
    %7 = arith.addf %4, %6 : vector<1x576x8xf32>
    %cst_8 = arith.constant 0.000000e+00 : f32
    %8 = vector.broadcast %cst_8 : f32 to vector<1x576x8xf32>
    %9 = arith.maximumf %7, %8 : vector<1x576x8xf32>
    %10 = vector.shape_cast %9 : vector<1x576x8xf32> to vector<1x4x9x16x8xf32>
    %c0_9 = arith.constant 0 : index
    %c0_10 = arith.constant 0 : index
    %11 = vector.load %arg2[%c0_9, %c0_10] : memref<10x8xf32, #tpu.memory_space<vmem>>, vector<10x8xf32>
    %12 = vector.extract_strided_slice %0 {offsets = [0, 0, 0, 0, 0], sizes = [1, 1, 8, 8, 8], strides = [1, 1, 1, 1, 1]} : vector<1x4x9x16x8xf32> to vector<1x1x8x8x8xf32>
    %13 = vector.shape_cast %12 : vector<1x1x8x8x8xf32> to vector<1x8x8x8xf32>
    %14 = vector.extract_strided_slice %11 {offsets = [0, 0], sizes = [1, 8], strides = [1, 1]} : vector<10x8xf32> to vector<1x8xf32>
    %15 = vector.shape_cast %14 : vector<1x8xf32> to vector<1x1x1x8xf32>
    %16 = vector.broadcast %15 : vector<1x1x1x8xf32> to vector<1x8x8x8xf32>
    %17 = arith.mulf %13, %16 : vector<1x8x8x8xf32>
    %18 = vector.extract_strided_slice %0 {offsets = [0, 1, 0, 0, 0], sizes = [1, 1, 8, 8, 8], strides = [1, 1, 1, 1, 1]} : vector<1x4x9x16x8xf32> to vector<1x1x8x8x8xf32>
    %19 = vector.shape_cast %18 : vector<1x1x8x8x8xf32> to vector<1x8x8x8xf32>
    %20 = vector.extract_strided_slice %11 {offsets = [1, 0], sizes = [1, 8], strides = [1, 1]} : vector<10x8xf32> to vector<1x8xf32>
    %21 = vector.shape_cast %20 : vector<1x8xf32> to vector<1x1x1x8xf32>
    %22 = vector.broadcast %21 : vector<1x1x1x8xf32> to vector<1x8x8x8xf32>
    %23 = arith.mulf %19, %22 : vector<1x8x8x8xf32>
    %24 = arith.addf %17, %23 : vector<1x8x8x8xf32>
    %25 = vector.extract_strided_slice %0 {offsets = [0, 0, 0, 1, 0], sizes = [1, 1, 8, 8, 8], strides = [1, 1, 1, 1, 1]} : vector<1x4x9x16x8xf32> to vector<1x1x8x8x8xf32>
    %26 = vector.shape_cast %25 : vector<1x1x8x8x8xf32> to vector<1x8x8x8xf32>
    %27 = vector.extract_strided_slice %11 {offsets = [2, 0], sizes = [1, 8], strides = [1, 1]} : vector<10x8xf32> to vector<1x8xf32>
    %28 = vector.shape_cast %27 : vector<1x8xf32> to vector<1x1x1x8xf32>
    %29 = vector.broadcast %28 : vector<1x1x1x8xf32> to vector<1x8x8x8xf32>
    %30 = arith.mulf %26, %29 : vector<1x8x8x8xf32>
    %31 = arith.addf %24, %30 : vector<1x8x8x8xf32>
    %32 = vector.extract_strided_slice %0 {offsets = [0, 2, 0, 0, 0], sizes = [1, 1, 8, 8, 8], strides = [1, 1, 1, 1, 1]} : vector<1x4x9x16x8xf32> to vector<1x1x8x8x8xf32>
    %33 = vector.shape_cast %32 : vector<1x1x8x8x8xf32> to vector<1x8x8x8xf32>
    %34 = vector.extract_strided_slice %11 {offsets = [3, 0], sizes = [1, 8], strides = [1, 1]} : vector<10x8xf32> to vector<1x8xf32>
    %35 = vector.shape_cast %34 : vector<1x8xf32> to vector<1x1x1x8xf32>
    %36 = vector.broadcast %35 : vector<1x1x1x8xf32> to vector<1x8x8x8xf32>
    %37 = arith.mulf %33, %36 : vector<1x8x8x8xf32>
    %38 = arith.addf %31, %37 : vector<1x8x8x8xf32>
    %39 = vector.extract_strided_slice %0 {offsets = [0, 3, 0, 0, 0], sizes = [1, 1, 8, 8, 8], strides = [1, 1, 1, 1, 1]} : vector<1x4x9x16x8xf32> to vector<1x1x8x8x8xf32>
    %40 = vector.shape_cast %39 : vector<1x1x8x8x8xf32> to vector<1x8x8x8xf32>
    %41 = vector.extract_strided_slice %11 {offsets = [4, 0], sizes = [1, 8], strides = [1, 1]} : vector<10x8xf32> to vector<1x8xf32>
    %42 = vector.shape_cast %41 : vector<1x8xf32> to vector<1x1x1x8xf32>
    %43 = vector.broadcast %42 : vector<1x1x1x8xf32> to vector<1x8x8x8xf32>
    %44 = arith.mulf %40, %43 : vector<1x8x8x8xf32>
    %45 = arith.addf %38, %44 : vector<1x8x8x8xf32>
    %46 = vector.extract_strided_slice %0 {offsets = [0, 2, 0, 1, 0], sizes = [1, 1, 8, 8, 8], strides = [1, 1, 1, 1, 1]} : vector<1x4x9x16x8xf32> to vector<1x1x8x8x8xf32>
    %47 = vector.shape_cast %46 : vector<1x1x8x8x8xf32> to vector<1x8x8x8xf32>
    %48 = vector.extract_strided_slice %11 {offsets = [5, 0], sizes = [1, 8], strides = [1, 1]} : vector<10x8xf32> to vector<1x8xf32>
    %49 = vector.shape_cast %48 : vector<1x8xf32> to vector<1x1x1x8xf32>
    %50 = vector.broadcast %49 : vector<1x1x1x8xf32> to vector<1x8x8x8xf32>
    %51 = arith.mulf %47, %50 : vector<1x8x8x8xf32>
    %52 = arith.addf %45, %51 : vector<1x8x8x8xf32>
    %53 = vector.extract_strided_slice %0 {offsets = [0, 0, 1, 0, 0], sizes = [1, 1, 8, 8, 8], strides = [1, 1, 1, 1, 1]} : vector<1x4x9x16x8xf32> to vector<1x1x8x8x8xf32>
    %54 = vector.shape_cast %53 : vector<1x1x8x8x8xf32> to vector<1x8x8x8xf32>
    %55 = vector.extract_strided_slice %11 {offsets = [6, 0], sizes = [1, 8], strides = [1, 1]} : vector<10x8xf32> to vector<1x8xf32>
    %56 = vector.shape_cast %55 : vector<1x8xf32> to vector<1x1x1x8xf32>
    %57 = vector.broadcast %56 : vector<1x1x1x8xf32> to vector<1x8x8x8xf32>
    %58 = arith.mulf %54, %57 : vector<1x8x8x8xf32>
    %59 = arith.addf %52, %58 : vector<1x8x8x8xf32>
    %60 = vector.extract_strided_slice %0 {offsets = [0, 1, 1, 0, 0], sizes = [1, 1, 8, 8, 8], strides = [1, 1, 1, 1, 1]} : vector<1x4x9x16x8xf32> to vector<1x1x8x8x8xf32>
    %61 = vector.shape_cast %60 : vector<1x1x8x8x8xf32> to vector<1x8x8x8xf32>
    %62 = vector.extract_strided_slice %11 {offsets = [7, 0], sizes = [1, 8], strides = [1, 1]} : vector<10x8xf32> to vector<1x8xf32>
    %63 = vector.shape_cast %62 : vector<1x8xf32> to vector<1x1x1x8xf32>
    %64 = vector.broadcast %63 : vector<1x1x1x8xf32> to vector<1x8x8x8xf32>
    %65 = arith.mulf %61, %64 : vector<1x8x8x8xf32>
    %66 = arith.addf %59, %65 : vector<1x8x8x8xf32>
    %67 = vector.extract_strided_slice %0 {offsets = [0, 0, 1, 1, 0], sizes = [1, 1, 8, 8, 8], strides = [1, 1, 1, 1, 1]} : vector<1x4x9x16x8xf32> to vector<1x1x8x8x8xf32>
    %68 = vector.shape_cast %67 : vector<1x1x8x8x8xf32> to vector<1x8x8x8xf32>
    %69 = vector.extract_strided_slice %11 {offsets = [8, 0], sizes = [1, 8], strides = [1, 1]} : vector<10x8xf32> to vector<1x8xf32>
    %70 = vector.shape_cast %69 : vector<1x8xf32> to vector<1x1x1x8xf32>
    %71 = vector.broadcast %70 : vector<1x1x1x8xf32> to vector<1x8x8x8xf32>
    %72 = arith.mulf %68, %71 : vector<1x8x8x8xf32>
    %73 = arith.addf %66, %72 : vector<1x8x8x8xf32>
    %74 = vector.extract_strided_slice %11 {offsets = [9, 0], sizes = [1, 8], strides = [1, 1]} : vector<10x8xf32> to vector<1x8xf32>
    %75 = vector.shape_cast %74 : vector<1x8xf32> to vector<1x1x1x8xf32>
    %76 = vector.broadcast %75 : vector<1x1x1x8xf32> to vector<1x8x8x8xf32>
    %77 = arith.addf %73, %76 : vector<1x8x8x8xf32>
    %c0_11 = arith.constant 0 : index
    %c0_12 = arith.constant 0 : index
    %78 = vector.load %arg3[%c0_11, %c0_12] : memref<10x8xf32, #tpu.memory_space<vmem>>, vector<10x8xf32>
    %79 = vector.extract_strided_slice %10 {offsets = [0, 0, 0, 0, 0], sizes = [1, 1, 8, 8, 8], strides = [1, 1, 1, 1, 1]} : vector<1x4x9x16x8xf32> to vector<1x1x8x8x8xf32>
    %80 = vector.shape_cast %79 : vector<1x1x8x8x8xf32> to vector<1x8x8x8xf32>
    %81 = vector.extract_strided_slice %78 {offsets = [0, 0], sizes = [1, 8], strides = [1, 1]} : vector<10x8xf32> to vector<1x8xf32>
    %82 = vector.shape_cast %81 : vector<1x8xf32> to vector<1x1x1x8xf32>
    %83 = vector.broadcast %82 : vector<1x1x1x8xf32> to vector<1x8x8x8xf32>
    %84 = arith.mulf %80, %83 : vector<1x8x8x8xf32>
    %85 = vector.extract_strided_slice %10 {offsets = [0, 1, 0, 0, 0], sizes = [1, 1, 8, 8, 8], strides = [1, 1, 1, 1, 1]} : vector<1x4x9x16x8xf32> to vector<1x1x8x8x8xf32>
    %86 = vector.shape_cast %85 : vector<1x1x8x8x8xf32> to vector<1x8x8x8xf32>
    %87 = vector.extract_strided_slice %78 {offsets = [1, 0], sizes = [1, 8], strides = [1, 1]} : vector<10x8xf32> to vector<1x8xf32>
    %88 = vector.shape_cast %87 : vector<1x8xf32> to vector<1x1x1x8xf32>
    %89 = vector.broadcast %88 : vector<1x1x1x8xf32> to vector<1x8x8x8xf32>
    %90 = arith.mulf %86, %89 : vector<1x8x8x8xf32>
    %91 = arith.addf %84, %90 : vector<1x8x8x8xf32>
    %92 = vector.extract_strided_slice %10 {offsets = [0, 0, 0, 1, 0], sizes = [1, 1, 8, 8, 8], strides = [1, 1, 1, 1, 1]} : vector<1x4x9x16x8xf32> to vector<1x1x8x8x8xf32>
    %93 = vector.shape_cast %92 : vector<1x1x8x8x8xf32> to vector<1x8x8x8xf32>
    %94 = vector.extract_strided_slice %78 {offsets = [2, 0], sizes = [1, 8], strides = [1, 1]} : vector<10x8xf32> to vector<1x8xf32>
    %95 = vector.shape_cast %94 : vector<1x8xf32> to vector<1x1x1x8xf32>
    %96 = vector.broadcast %95 : vector<1x1x1x8xf32> to vector<1x8x8x8xf32>
    %97 = arith.mulf %93, %96 : vector<1x8x8x8xf32>
    %98 = arith.addf %91, %97 : vector<1x8x8x8xf32>
    %99 = vector.extract_strided_slice %10 {offsets = [0, 2, 0, 0, 0], sizes = [1, 1, 8, 8, 8], strides = [1, 1, 1, 1, 1]} : vector<1x4x9x16x8xf32> to vector<1x1x8x8x8xf32>
    %100 = vector.shape_cast %99 : vector<1x1x8x8x8xf32> to vector<1x8x8x8xf32>
    %101 = vector.extract_strided_slice %78 {offsets = [3, 0], sizes = [1, 8], strides = [1, 1]} : vector<10x8xf32> to vector<1x8xf32>
    %102 = vector.shape_cast %101 : vector<1x8xf32> to vector<1x1x1x8xf32>
    %103 = vector.broadcast %102 : vector<1x1x1x8xf32> to vector<1x8x8x8xf32>
    %104 = arith.mulf %100, %103 : vector<1x8x8x8xf32>
    %105 = arith.addf %98, %104 : vector<1x8x8x8xf32>
    %106 = vector.extract_strided_slice %10 {offsets = [0, 3, 0, 0, 0], sizes = [1, 1, 8, 8, 8], strides = [1, 1, 1, 1, 1]} : vector<1x4x9x16x8xf32> to vector<1x1x8x8x8xf32>
    %107 = vector.shape_cast %106 : vector<1x1x8x8x8xf32> to vector<1x8x8x8xf32>
    %108 = vector.extract_strided_slice %78 {offsets = [4, 0], sizes = [1, 8], strides = [1, 1]} : vector<10x8xf32> to vector<1x8xf32>
    %109 = vector.shape_cast %108 : vector<1x8xf32> to vector<1x1x1x8xf32>
    %110 = vector.broadcast %109 : vector<1x1x1x8xf32> to vector<1x8x8x8xf32>
    %111 = arith.mulf %107, %110 : vector<1x8x8x8xf32>
    %112 = arith.addf %105, %111 : vector<1x8x8x8xf32>
    %113 = vector.extract_strided_slice %10 {offsets = [0, 2, 0, 1, 0], sizes = [1, 1, 8, 8, 8], strides = [1, 1, 1, 1, 1]} : vector<1x4x9x16x8xf32> to vector<1x1x8x8x8xf32>
    %114 = vector.shape_cast %113 : vector<1x1x8x8x8xf32> to vector<1x8x8x8xf32>
    %115 = vector.extract_strided_slice %78 {offsets = [5, 0], sizes = [1, 8], strides = [1, 1]} : vector<10x8xf32> to vector<1x8xf32>
    %116 = vector.shape_cast %115 : vector<1x8xf32> to vector<1x1x1x8xf32>
    %117 = vector.broadcast %116 : vector<1x1x1x8xf32> to vector<1x8x8x8xf32>
    %118 = arith.mulf %114, %117 : vector<1x8x8x8xf32>
    %119 = arith.addf %112, %118 : vector<1x8x8x8xf32>
    %120 = vector.extract_strided_slice %10 {offsets = [0, 0, 1, 0, 0], sizes = [1, 1, 8, 8, 8], strides = [1, 1, 1, 1, 1]} : vector<1x4x9x16x8xf32> to vector<1x1x8x8x8xf32>
    %121 = vector.shape_cast %120 : vector<1x1x8x8x8xf32> to vector<1x8x8x8xf32>
    %122 = vector.extract_strided_slice %78 {offsets = [6, 0], sizes = [1, 8], strides = [1, 1]} : vector<10x8xf32> to vector<1x8xf32>
    %123 = vector.shape_cast %122 : vector<1x8xf32> to vector<1x1x1x8xf32>
    %124 = vector.broadcast %123 : vector<1x1x1x8xf32> to vector<1x8x8x8xf32>
    %125 = arith.mulf %121, %124 : vector<1x8x8x8xf32>
    %126 = arith.addf %119, %125 : vector<1x8x8x8xf32>
    %127 = vector.extract_strided_slice %10 {offsets = [0, 1, 1, 0, 0], sizes = [1, 1, 8, 8, 8], strides = [1, 1, 1, 1, 1]} : vector<1x4x9x16x8xf32> to vector<1x1x8x8x8xf32>
    %128 = vector.shape_cast %127 : vector<1x1x8x8x8xf32> to vector<1x8x8x8xf32>
    %129 = vector.extract_strided_slice %78 {offsets = [7, 0], sizes = [1, 8], strides = [1, 1]} : vector<10x8xf32> to vector<1x8xf32>
    %130 = vector.shape_cast %129 : vector<1x8xf32> to vector<1x1x1x8xf32>
    %131 = vector.broadcast %130 : vector<1x1x1x8xf32> to vector<1x8x8x8xf32>
    %132 = arith.mulf %128, %131 : vector<1x8x8x8xf32>
    %133 = arith.addf %126, %132 : vector<1x8x8x8xf32>
    %134 = vector.extract_strided_slice %10 {offsets = [0, 0, 1, 1, 0], sizes = [1, 1, 8, 8, 8], strides = [1, 1, 1, 1, 1]} : vector<1x4x9x16x8xf32> to vector<1x1x8x8x8xf32>
    %135 = vector.shape_cast %134 : vector<1x1x8x8x8xf32> to vector<1x8x8x8xf32>
    %136 = vector.extract_strided_slice %78 {offsets = [8, 0], sizes = [1, 8], strides = [1, 1]} : vector<10x8xf32> to vector<1x8xf32>
    %137 = vector.shape_cast %136 : vector<1x8xf32> to vector<1x1x1x8xf32>
    %138 = vector.broadcast %137 : vector<1x1x1x8xf32> to vector<1x8x8x8xf32>
    %139 = arith.mulf %135, %138 : vector<1x8x8x8xf32>
    %140 = arith.addf %133, %139 : vector<1x8x8x8xf32>
    %141 = vector.extract_strided_slice %78 {offsets = [9, 0], sizes = [1, 8], strides = [1, 1]} : vector<10x8xf32> to vector<1x8xf32>
    %142 = vector.shape_cast %141 : vector<1x8xf32> to vector<1x1x1x8xf32>
    %143 = vector.broadcast %142 : vector<1x1x1x8xf32> to vector<1x8x8x8xf32>
    %144 = arith.addf %140, %143 : vector<1x8x8x8xf32>
    %145 = tpu.concatenate %77, %144 in 3 : vector<1x8x8x8xf32>, vector<1x8x8x8xf32> -> vector<1x8x8x16xf32>
    %146 = vector.shape_cast %145 : vector<1x8x8x16xf32> to vector<64x16xf32>
    %c0_13 = arith.constant 0 : index
    %c0_14 = arith.constant 0 : index
    %147 = vector.load %arg6[%c0_13, %c0_14] : memref<16x16xf32, #tpu.memory_space<vmem>>, vector<16x16xf32>
    %cst_15 = arith.constant dense<0.000000e+00> : vector<64x16xf32>
    %148 = tpu.matmul %146, %147, %cst_15 {dimension_numbers = #tpu.dot_dimension_numbers<[1], [0], [0], [1], [0, 0, 1, 1], [], []>} : vector<64x16xf32>, vector<16x16xf32>, vector<64x16xf32> -> vector<64x16xf32>
    %c0_16 = arith.constant 0 : index
    %c0_17 = arith.constant 0 : index
    %149 = vector.load %arg7[%c0_16, %c0_17] : memref<1x16xf32, #tpu.memory_space<vmem>>, vector<1x16xf32>
    %150 = vector.broadcast %149 : vector<1x16xf32> to vector<64x16xf32>
    %151 = arith.addf %148, %150 : vector<64x16xf32>
    %cst_18 = arith.constant 0.000000e+00 : f32
    %152 = vector.broadcast %cst_18 : f32 to vector<64x16xf32>
    %153 = arith.maximumf %151, %152 : vector<64x16xf32>
    %154 = vector.shape_cast %153 : vector<64x16xf32> to vector<1x8x8x16xf32>
    %c0_19 = arith.constant 0 : index
    %c0_20 = arith.constant 0 : index
    %c0_21 = arith.constant 0 : index
    %c0_22 = arith.constant 0 : index
    %155 = vector.load %arg8[%c0_19, %c0_20, %c0_21, %c0_22] : memref<1x8x8x16xf32, #tpu.memory_space<vmem>>, vector<1x8x8x16xf32>
    tpu.vector_store %arg8[%c0_19, %c0_20, %c0_21, %c0_22], %154 {strides = array<i32>} : memref<1x8x8x16xf32, #tpu.memory_space<vmem>>, vector<1x8x8x16xf32>,
    return
  }
  func.func @transform_0(%arg0: i32) -> (i32, i32, i32, i32, i32) {
    %c0_i32 = arith.constant 0 : i32
    %c0_i32_0 = arith.constant 0 : i32
    %c0_i32_1 = arith.constant 0 : i32
    %c0_i32_2 = arith.constant 0 : i32
    %c0_i32_3 = arith.constant 0 : i32
    return %arg0, %c0_i32, %c0_i32_0, %c0_i32_1, %c0_i32_2 : i32, i32, i32, i32, i32
  }
  func.func @transform_1(%arg0: i32) -> (i32, i32) {
    %c0_i32 = arith.constant 0 : i32
    %c0_i32_0 = arith.constant 0 : i32
    %c0_i32_1 = arith.constant 0 : i32
    return %c0_i32, %c0_i32_0 : i32, i32
  }
  func.func @transform_2(%arg0: i32) -> (i32, i32) {
    %c0_i32 = arith.constant 0 : i32
    %c0_i32_0 = arith.constant 0 : i32
    %c0_i32_1 = arith.constant 0 : i32
    return %c0_i32, %c0_i32_0 : i32, i32
  }
  func.func @transform_3(%arg0: i32) -> (i32, i32) {
    %c0_i32 = arith.constant 0 : i32
    %c0_i32_0 = arith.constant 0 : i32
    %c0_i32_1 = arith.constant 0 : i32
    return %c0_i32, %c0_i32_0 : i32, i32
  }
  func.func @transform_4(%arg0: i32) -> (i32, i32) {
    %c0_i32 = arith.constant 0 : i32
    %c0_i32_0 = arith.constant 0 : i32
    %c0_i32_1 = arith.constant 0 : i32
    return %c0_i32, %c0_i32_0 : i32, i32
  }
  func.func @transform_5(%arg0: i32) -> (i32, i32) {
    %c0_i32 = arith.constant 0 : i32
    %c0_i32_0 = arith.constant 0 : i32
    %c0_i32_1 = arith.constant 0 : i32
    return %c0_i32, %c0_i32_0 : i32, i32
  }
  func.func @transform_6(%arg0: i32) -> (i32, i32) {
    %c0_i32 = arith.constant 0 : i32
    %c0_i32_0 = arith.constant 0 : i32
    %c0_i32_1 = arith.constant 0 : i32
    return %c0_i32, %c0_i32_0 : i32, i32
  }
  func.func @transform_7(%arg0: i32) -> (i32, i32, i32, i32) {
    %c0_i32 = arith.constant 0 : i32
    %c0_i32_0 = arith.constant 0 : i32
    %c0_i32_1 = arith.constant 0 : i32
    %c0_i32_2 = arith.constant 0 : i32
    return %arg0, %c0_i32, %c0_i32_0, %c0_i32_1 : i32, i32, i32, i32
  }
}

</mosaic_0001>

<llo_original>
// kernel: mul.65
$region0: #{mul.65}
  %s0 = inlined_call_operand.vmem [shape: f32[9,16], index: 0, kind: input, shape index: {}]
  %s1 = inlined_call_operand.vmem [shape: f32[144], index: 1, kind: output, shape index: {}]
  $region1: #{mul.65} parent=0
    #allocation0 [shape = 'u8[4096]{0}', space=vmem, size = 0x1000, scoped, tag = 'scoped mem for output reshape']
    %s2 = smov 3
    %v3 = vld [vmem:[%s0] ss:$8 sm:%s2]
    %vm4 = vcmask 130048
    %5 = vst.msk [vmem:[#allocation0] sm:$0x3] %vm4, %v3
    %s6 = scalar_lea.vmem %s0, 7
    %v7 = vld [vmem:[%s6] sm:$0x1]
    %8 = vrot.lane.b32.xlu0 %v7, 112
    %v9 = vpop.permute.xlu0 %8
    %vm10 = vcmask 1048448
    %11 = vst.msk [vmem:[#allocation0] sm:$0x1] %vm10, %v9
    %s12 = scalar_lea.vmem %s0, 6
    %v13 = vld [vmem:[%s12] sm:$0x1]
    %14 = vrot.lane.b32.xlu0 %v13, 96
    %v15 = vpop.permute.xlu0 %14
    %vm16 = vcmask 917248
    %17 = vst.msk [vmem:[#allocation0] sm:$0x1] %vm16, %v15
    %s18 = scalar_lea.vmem %s0, 5
    %v19 = vld [vmem:[%s18] sm:$0x1]
    %20 = vrot.lane.b32.xlu0 %v19, 80
    %v21 = vpop.permute.xlu0 %20
    %vm22 = vcmask 786048
    %23 = vst.msk [vmem:[#allocation0] sm:$0x1] %vm22, %v21
    %s24 = scalar_lea.vmem %s0, 4
    %v25 = vld [vmem:[%s24] sm:$0x1]
    %26 = vrot.lane.b32.xlu0 %v25, 64
    %v27 = vpop.permute.xlu0 %26
    %vm28 = vcmask 654848
    %29 = vst.msk [vmem:[#allocation0] sm:$0x1] %vm28, %v27
    %s30 = scalar_lea.vmem %s0, 3
    %v31 = vld [vmem:[%s30] sm:$0x1]
    %32 = vrot.lane.b32.xlu0 %v31, 48
    %v33 = vpop.permute.xlu0 %32
    %vm34 = vcmask 523648
    %35 = vst.msk [vmem:[#allocation0] sm:$0x1] %vm34, %v33
    %s36 = scalar_lea.vmem %s0, 2
    %v37 = vld [vmem:[%s36] sm:$0x1]
    %38 = vrot.lane.b32.xlu0 %v37, 32
    %v39 = vpop.permute.xlu0 %38
    %vm40 = vcmask 392448
    %41 = vst.msk [vmem:[#allocation0] sm:$0x1] %vm40, %v39
    %s42 = scalar_lea.vmem %s0, 1
    %v43 = vld [vmem:[%s42] sm:$0x1]
    %44 = vrot.lane.b32.xlu0 %v43, 16
    %v45 = vpop.permute.xlu0 %44
    %vm46 = vcmask 261248
    %47 = vst.msk [vmem:[#allocation0] sm:$0x1] %vm46, %v45
    %s49 = sshllo.u32 0, 2
    %v51 = vld [vmem:[#allocation0] sm:%s49]
    %s52 = sshllo.u32 0, 2
    %53 = vst [vmem:[%s1] sm:%s52] %v51

// kernel: down_block.1
$region0: #{down_block.1}
  #allocation0 [shape = 'u32[]', space=smem, size = 0x4, offset = 0x4, fixed_abs, tag = 'smem constant byte address 0x4 - core index']
  #allocation1 [shape = 'u32[144,128]{1,0:T(1,128)}', space=vmem, size = 0x12000, scoped, tag = 'internal scratch']
  %s0 = inlined_call_operand.vmem [shape: f32[2,4,9,16,8], index: 0, kind: input, shape index: {}]
  %s1 = inlined_call_operand.vmem [shape: f32[10,8], index: 1, kind: input, shape index: {}]
  %s2 = inlined_call_operand.vmem [shape: f32[10,8], index: 2, kind: input, shape index: {}]
  %s3 = inlined_call_operand.vmem [shape: f32[8,8], index: 3, kind: input, shape index: {}]
  %s4 = inlined_call_operand.vmem [shape: f32[576,8], index: 4, kind: input, shape index: {}]
  %s5 = inlined_call_operand.vmem [shape: f32[16,16], index: 5, kind: input, shape index: {}]
  %s6 = inlined_call_operand.vmem [shape: f32[1,16], index: 6, kind: input, shape index: {}]
  %s7 = inlined_call_operand.hbm [shape: f32[2,8,8,16], index: 7, kind: output, shape index: {}]
  %s8 = sld [smem:[#allocation0]]
  $region61: #{down_block.1} parent=0
    _
  %s10 = ssub.s32 1, %s8
  %s11 = scalar_select 0, %s10, %s8
  $region1: #{down_block.1} parent=0
    #allocation2 [shape = 'u8[65536]{0}', space=vmem, size = 0x10000, scoped, tag = 'output window, operand 0']
    #allocation3 [shape = 's32[2]{0}', space=sflag, size = 0x8, scoped, tag = 'scoped memory for down_block.1']
    %12 = vsyncpa [#allocation3], 0
    %s13 = scalar_lea.sflag [#allocation3], 1
    %14 = vsyncpa %s13, 0
    loop: start=0, step=1, limit=4
    $region2: #{down_block.1} parent=1 // loop_pre_header
      _
    $region3: #{down_block.1} parent=1 // loop_header
      %s16 = sphi 0, %s20
      %p17 = scmp.ge.s32.totalorder %s16, 4
      %s26 = sphi 0, %s28
      %s29 = sphi 0, %s26
      %s30 = sphi 0, %s29
      %s46 = sphi 0, %s30
      %s50 = sphi 0, %s50
      %s52 = sphi 0, %s50
      %s53 = sphi 0, %s52
      %s67 = sphi 0, %s53
      %s71 = sphi 0, %s71
      %s73 = sphi 0, %s71
      %s74 = sphi 0, %s73
      %s88 = sphi 0, %s74
      %s92 = sphi 0, %s92
      %s94 = sphi 0, %s92
      %s95 = sphi 0, %s94
      %s109 = sphi 0, %s95
      %s113 = sphi 0, %s113
      %s115 = sphi 0, %s113
      %s116 = sphi 0, %s115
      %s130 = sphi 0, %s116
      %s134 = sphi 0, %s134
      %s136 = sphi 0, %s134
      %s137 = sphi 0, %s136
      %s151 = sphi 0, %s137
      %s155 = sphi 0, %s155
      %s157 = sphi 0, %s155
      %s158 = sphi 0, %s157
      %s172 = sphi 0, %s158
      %s178 = sphi 0, %s180
      %s181 = sphi 0, %s178
      %s182 = sphi 0, %s181
      %s198 = sphi 0, %s182
    $region4: #{down_block.1} parent=1 // loop_header_branch
      %19 = sbr.rel (%p17) target = $region8
    $region5: #{down_block.1} parent=1 // loop_body
      %s21 = ssub.s32 %s16, 1
      %s22 = ssub.s32 %s16, 2
      %s23 = sadd.s32 %s16, 1
      %s24 = ssub.s32 %s16, %s23
      %p25 = scmp.eq.s32.totalorder %s24, 0
      %s27 = sadd.s32 %s26, 1
      %s28 = scalar_select %p25, %s26, %s27
      %p31 = pneg %p25
      %p32 = scmp.eq.s32.totalorder %s16, 1
      %p33 = por %p31, %p32
      %p34 = scmp.ne.s32.totalorder %s26, %s29
      %p35 = scmp.eq.s32.totalorder %s16, 0
      %p36 = por %p34, %p35
      %p37 = scmp.ne.s32.totalorder %s26, %s29
      %p38 = scmp.eq.s32.totalorder %s21, 1
      %p39 = por %p37, %p38
      %p40 = scmp.ne.s32.totalorder %s29, %s30
      %p41 = scmp.eq.s32.totalorder %s21, 0
      %p42 = por %p40, %p41
      %p43 = scmp.ne.s32.totalorder %s29, %s30
      %p44 = scmp.eq.s32.totalorder %s22, 1
      %p45 = por %p43, %p44
      %p47 = scmp.ne.s32.totalorder %s30, %s46
      %p48 = scmp.eq.s32.totalorder %s22, 0
      %p49 = por %p47, %p48
      %s51 = sadd.s32 %s50, 1
      %p54 = scmp.eq.s32.totalorder %s16, 1
      %p55 = scmp.ne.s32.totalorder %s50, %s52
      %p56 = scmp.eq.s32.totalorder %s16, 0
      %p57 = por %p55, %p56
      %p58 = scmp.ne.s32.totalorder %s50, %s52
      %p59 = scmp.eq.s32.totalorder %s21, 1
      %p60 = por %p58, %p59
      %p61 = scmp.ne.s32.totalorder %s52, %s53
      %p62 = scmp.eq.s32.totalorder %s21, 0
      %p63 = por %p61, %p62
      %p64 = scmp.ne.s32.totalorder %s52, %s53
      %p65 = scmp.eq.s32.totalorder %s22, 1
      %p66 = por %p64, %p65
      %p68 = scmp.ne.s32.totalorder %s53, %s67
      %p69 = scmp.eq.s32.totalorder %s22, 0
      %p70 = por %p68, %p69
      %s72 = sadd.s32 %s71, 1
      %p75 = scmp.eq.s32.totalorder %s16, 1
      %p76 = scmp.ne.s32.totalorder %s71, %s73
      %p77 = scmp.eq.s32.totalorder %s16, 0
      %p78 = por %p76, %p77
      %p79 = scmp.ne.s32.totalorder %s71, %s73
      %p80 = scmp.eq.s32.totalorder %s21, 1
      %p81 = por %p79, %p80
      %p82 = scmp.ne.s32.totalorder %s73, %s74
      %p83 = scmp.eq.s32.totalorder %s21, 0
      %p84 = por %p82, %p83
      %p85 = scmp.ne.s32.totalorder %s73, %s74
      %p86 = scmp.eq.s32.totalorder %s22, 1
      %p87 = por %p85, %p86
      %p89 = scmp.ne.s32.totalorder %s74, %s88
      %p90 = scmp.eq.s32.totalorder %s22, 0
      %p91 = por %p89, %p90
      %s93 = sadd.s32 %s92, 1
      %p96 = scmp.eq.s32.totalorder %s16, 1
      %p97 = scmp.ne.s32.totalorder %s92, %s94
      %p98 = scmp.eq.s32.totalorder %s16, 0
      %p99 = por %p97, %p98
      %p100 = scmp.ne.s32.totalorder %s92, %s94
      %p101 = scmp.eq.s32.totalorder %s21, 1
      %p102 = por %p100, %p101
      %p103 = scmp.ne.s32.totalorder %s94, %s95
      %p104 = scmp.eq.s32.totalorder %s21, 0
      %p105 = por %p103, %p104
      %p106 = scmp.ne.s32.totalorder %s94, %s95
      %p107 = scmp.eq.s32.totalorder %s22, 1
      %p108 = por %p106, %p107
      %p110 = scmp.ne.s32.totalorder %s95, %s109
      %p111 = scmp.eq.s32.totalorder %s22, 0
      %p112 = por %p110, %p111
      %s114 = sadd.s32 %s113, 1
      %p117 = scmp.eq.s32.totalorder %s16, 1
      %p118 = scmp.ne.s32.totalorder %s113, %s115
      %p119 = scmp.eq.s32.totalorder %s16, 0
      %p120 = por %p118, %p119
      %p121 = scmp.ne.s32.totalorder %s113, %s115
      %p122 = scmp.eq.s32.totalorder %s21, 1
      %p123 = por %p121, %p122
      %p124 = scmp.ne.s32.totalorder %s115, %s116
      %p125 = scmp.eq.s32.totalorder %s21, 0
      %p126 = por %p124, %p125
      %p127 = scmp.ne.s32.totalorder %s115, %s116
      %p128 = scmp.eq.s32.totalorder %s22, 1
      %p129 = por %p127, %p128
      %p131 = scmp.ne.s32.totalorder %s116, %s130
      %p132 = scmp.eq.s32.totalorder %s22, 0
      %p133 = por %p131, %p132
      %s135 = sadd.s32 %s134, 1
      %p138 = scmp.eq.s32.totalorder %s16, 1
      %p139 = scmp.ne.s32.totalorder %s134, %s136
      %p140 = scmp.eq.s32.totalorder %s16, 0
      %p141 = por %p139, %p140
      %p142 = scmp.ne.s32.totalorder %s134, %s136
      %p143 = scmp.eq.s32.totalorder %s21, 1
      %p144 = por %p142, %p143
      %p145 = scmp.ne.s32.totalorder %s136, %s137
      %p146 = scmp.eq.s32.totalorder %s21, 0
      %p147 = por %p145, %p146
      %p148 = scmp.ne.s32.totalorder %s136, %s137
      %p149 = scmp.eq.s32.totalorder %s22, 1
      %p150 = por %p148, %p149
      %p152 = scmp.ne.s32.totalorder %s137, %s151
      %p153 = scmp.eq.s32.totalorder %s22, 0
      %p154 = por %p152, %p153
      %s156 = sadd.s32 %s155, 1
      %p159 = scmp.eq.s32.totalorder %s16, 1
      %p160 = scmp.ne.s32.totalorder %s155, %s157
      %p161 = scmp.eq.s32.totalorder %s16, 0
      %p162 = por %p160, %p161
      %p163 = scmp.ne.s32.totalorder %s155, %s157
      %p164 = scmp.eq.s32.totalorder %s21, 1
      %p165 = por %p163, %p164
      %p166 = scmp.ne.s32.totalorder %s157, %s158
      %p167 = scmp.eq.s32.totalorder %s21, 0
      %p168 = por %p166, %p167
      %p169 = scmp.ne.s32.totalorder %s157, %s158
      %p170 = scmp.eq.s32.totalorder %s22, 1
      %p171 = por %p169, %p170
      %p173 = scmp.ne.s32.totalorder %s158, %s172
      %p174 = scmp.eq.s32.totalorder %s22, 0
      %p175 = por %p173, %p174
      %s176 = ssub.s32 %s16, %s23
      %p177 = scmp.eq.s32.totalorder %s176, 0
      %s179 = sadd.s32 %s178, 1
      %s180 = scalar_select %p177, %s178, %s179
      %p183 = pneg %p177
      %p184 = scmp.eq.s32.totalorder %s16, 1
      %p185 = por %p183, %p184
      %p186 = scmp.ne.s32.totalorder %s178, %s181
      %p187 = scmp.eq.s32.totalorder %s16, 0
      %p188 = por %p186, %p187
      %p189 = scmp.ne.s32.totalorder %s178, %s181
      %p190 = scmp.eq.s32.totalorder %s21, 1
      %p191 = por %p189, %p190
      %p192 = scmp.ne.s32.totalorder %s181, %s182
      %p193 = scmp.eq.s32.totalorder %s21, 0
      %p194 = por %p192, %p193
      %p195 = scmp.ne.s32.totalorder %s181, %s182
      %p196 = scmp.eq.s32.totalorder %s22, 1
      %p197 = por %p195, %p196
      %p199 = scmp.ne.s32.totalorder %s182, %s198
      %p200 = scmp.eq.s32.totalorder %s22, 0
      %p201 = por %p199, %p200
      %p202 = scmp.le.s32.totalorder 1, %s16
      %p203 = scmp.lt.s32.totalorder %s16, 3
      %p204 = pnand %p202, %p203
      %p205 = pneg %p204
      // Predicated region
      $region9: #{down_block.1} parent=5 // pred_check
        _
      $region10: #{down_block.1} parent=5 // pred_check_branch
        %207 = sbr.rel (%p204) target = $region12
      $region11: #{down_block.1} parent=5 // pred_region
        %s208 = ssub.s32 %s16, 1
        // Predicated region
        $region13: #{down_block.1} parent=11 // pred_check
          %p209 = pneg %p63
        $region14: #{down_block.1} parent=11 // pred_check_branch
          %211 = sbr.rel (%p209) target = $region16
        $region15: #{down_block.1} parent=11 // pred_region
          _
        $region16: #{down_block.1} parent=11 // pred_fallthru
          _
        // Predicated region
        $region17: #{down_block.1} parent=11 // pred_check
          %p212 = pneg %p84
        $region18: #{down_block.1} parent=11 // pred_check_branch
          %214 = sbr.rel (%p212) target = $region20
        $region19: #{down_block.1} parent=11 // pred_region
          _
        $region20: #{down_block.1} parent=11 // pred_fallthru
          _
        // Predicated region
        $region21: #{down_block.1} parent=11 // pred_check
          %p215 = pneg %p105
        $region22: #{down_block.1} parent=11 // pred_check_branch
          %217 = sbr.rel (%p215) target = $region24
        $region23: #{down_block.1} parent=11 // pred_region
          _
        $region24: #{down_block.1} parent=11 // pred_fallthru
          _
        // Predicated region
        $region25: #{down_block.1} parent=11 // pred_check
          %p218 = pneg %p126
        $region26: #{down_block.1} parent=11 // pred_check_branch
          %220 = sbr.rel (%p218) target = $region28
        $region27: #{down_block.1} parent=11 // pred_region
          _
        $region28: #{down_block.1} parent=11 // pred_fallthru
          _
        // Predicated region
        $region29: #{down_block.1} parent=11 // pred_check
          %p221 = pneg %p147
        $region30: #{down_block.1} parent=11 // pred_check_branch
          %223 = sbr.rel (%p221) target = $region32
        $region31: #{down_block.1} parent=11 // pred_region
          _
        $region32: #{down_block.1} parent=11 // pred_fallthru
          _
        // Predicated region
        $region33: #{down_block.1} parent=11 // pred_check
          %p224 = pneg %p168
        $region34: #{down_block.1} parent=11 // pred_check_branch
          %226 = sbr.rel (%p224) target = $region36
        $region35: #{down_block.1} parent=11 // pred_region
          _
        $region36: #{down_block.1} parent=11 // pred_fallthru
          _
      $region12: #{down_block.1} parent=5 // pred_fallthru
        _
      %p227 = scmp.lt.s32.totalorder %s16, 2
      // Predicated region
      $region37: #{down_block.1} parent=5 // pred_check
        %p228 = pneg %p227
      $region38: #{down_block.1} parent=5 // pred_check_branch
        %230 = sbr.rel (%p228) target = $region40
      $region39: #{down_block.1} parent=5 // pred_region
        // Predicated region
        $region41: #{down_block.1} parent=39 // pred_check
          %p231 = pneg %p36
        $region42: #{down_block.1} parent=39 // pred_check_branch
          %233 = sbr.rel (%p231) target = $region44
        $region43: #{down_block.1} parent=39 // pred_region
          %p234 = scmp.lt.s32.totalorder %s16, 1
          %s235 = scalar_select %p234, %s16, 1
          %s236 = smul.addr %s235, 72
          %s237 = smul.addr %s236, 8
          %s238 = scalar_lea.vmem %s0, %s237
        $region44: #{down_block.1} parent=39 // pred_fallthru
          _
      $region40: #{down_block.1} parent=5 // pred_fallthru
        _
      %p239 = scmp.le.s32.totalorder 1, %s16
      %p240 = scmp.lt.s32.totalorder %s16, 3
      %p241 = pnand %p239, %p240
      %p242 = pneg %p241
      // Predicated region
      $region45: #{down_block.1} parent=5 // pred_check
        _
      $region46: #{down_block.1} parent=5 // pred_check_branch
        %244 = sbr.rel (%p241) target = $region48
      $region47: #{down_block.1} parent=5 // pred_region
        %s245 = ssub.s32 %s16, 1
        %p246 = scmp.lt.s32.totalorder %s21, 1
        %s247 = scalar_select %p246, %s21, 1
        %s248 = smul.addr %s247, 72
        %s249 = smul.addr %s248, 8
        %s250 = scalar_lea.vmem %s0, %s249
        %p251 = pneg %p42
        %p252 = pneg %p39
        %p253 = pneg %p63
        %p254 = pneg %p60
        %p255 = pneg %p84
        %p256 = pneg %p81
        %p257 = pneg %p105
        %p258 = pneg %p102
        %p259 = pneg %p126
        %p260 = pneg %p123
        %p261 = pneg %p147
        %p262 = pneg %p144
        %p263 = pneg %p168
        %p264 = pneg %p165
        %p265 = pneg %p194
        %p266 = pneg %p191
        %s267 = sand.u32 %s181, 1
        %s268 = scalar_lea.sflag [#allocation3], %s267
        %s269 = sand.u32 %s181, 1
        %s270 = smul.addr %s269, 64
        %s271 = scalar_lea.vmem [#allocation2], %s270
        %p272 = scmp.lt.s32.totalorder %s21, 1
        %s273 = scalar_select %p272, %s21, 1
        %s274 = smul.addr %s273, 72
        %s275 = smul.addr %s274, 8
        %s276 = scalar_lea.vmem %s0, %s275
        %v277 = vld [vmem:[%s276] sm:$0xff]
        %v278 = vld [vmem:[%s276 + $0x8] sm:$0xff]
        %v279 = vld [vmem:[%s276 + $0x10] sm:$0xff]
        %v280 = vld [vmem:[%s276 + $0x18] sm:$0xff]
        %v281 = vld [vmem:[%s276 + $0x20] sm:$0xff]
        %v282 = vld [vmem:[%s276 + $0x28] sm:$0xff]
        %v283 = vld [vmem:[%s276 + $0x30] sm:$0xff]
        %v284 = vld [vmem:[%s276 + $0x38] sm:$0xff]
        %v285 = vld [vmem:[%s276 + $0x40] sm:$0xff]
        %v286 = vld [vmem:[%s276 + $0x48] sm:$0xff]
        %v287 = vld [vmem:[%s276 + $0x50] sm:$0xff]
        %v288 = vld [vmem:[%s276 + $0x58] sm:$0xff]
        %v289 = vld [vmem:[%s276 + $0x60] sm:$0xff]
        %v290 = vld [vmem:[%s276 + $0x68] sm:$0xff]
        %v291 = vld [vmem:[%s276 + $0x70] sm:$0xff]
        %v292 = vld [vmem:[%s276 + $0x78] sm:$0xff]
        %v293 = vld [vmem:[%s276 + $0x80] sm:$0xff]
        %v294 = vld [vmem:[%s276 + $0x88] sm:$0xff]
        %v295 = vld [vmem:[%s276 + $0x90] sm:$0xff]
        %v296 = vld [vmem:[%s276 + $0x98] sm:$0xff]
        %v297 = vld [vmem:[%s276 + $0xa0] sm:$0xff]
        %v298 = vld [vmem:[%s276 + $0xa8] sm:$0xff]
        %v299 = vld [vmem:[%s276 + $0xb0] sm:$0xff]
        %v300 = vld [vmem:[%s276 + $0xb8] sm:$0xff]
        %v301 = vld [vmem:[%s276 + $0xc0] sm:$0xff]
        %v302 = vld [vmem:[%s276 + $0xc8] sm:$0xff]
        %v303 = vld [vmem:[%s276 + $0xd0] sm:$0xff]
        %v304 = vld [vmem:[%s276 + $0xd8] sm:$0xff]
        %v305 = vld [vmem:[%s276 + $0xe0] sm:$0xff]
        %v306 = vld [vmem:[%s276 + $0xe8] sm:$0xff]
        %v307 = vld [vmem:[%s276 + $0xf0] sm:$0xff]
        %v308 = vld [vmem:[%s276 + $0xf8] sm:$0xff]
        %v309 = vld [vmem:[%s276 + $0x100] sm:$0xff]
        %v310 = vld [vmem:[%s276 + $0x108] sm:$0xff]
        %v311 = vld [vmem:[%s276 + $0x110] sm:$0xff]
        %v312 = vld [vmem:[%s276 + $0x118] sm:$0xff]
        %v313 = vld [vmem:[%s276 + $0x120] sm:$0xff]
        %v314 = vld [vmem:[%s276 + $0x128] sm:$0xff]
        %v315 = vld [vmem:[%s276 + $0x130] sm:$0xff]
        %v316 = vld [vmem:[%s276 + $0x138] sm:$0xff]
        %v317 = vld [vmem:[%s276 + $0x140] sm:$0xff]
        %v318 = vld [vmem:[%s276 + $0x148] sm:$0xff]
        %v319 = vld [vmem:[%s276 + $0x150] sm:$0xff]
        %v320 = vld [vmem:[%s276 + $0x158] sm:$0xff]
        %v321 = vld [vmem:[%s276 + $0x160] sm:$0xff]
        %v322 = vld [vmem:[%s276 + $0x168] sm:$0xff]
        %v323 = vld [vmem:[%s276 + $0x170] sm:$0xff]
        %v324 = vld [vmem:[%s276 + $0x178] sm:$0xff]
        %v325 = vld [vmem:[%s276 + $0x180] sm:$0xff]
        %v326 = vld [vmem:[%s276 + $0x188] sm:$0xff]
        %v327 = vld [vmem:[%s276 + $0x190] sm:$0xff]
        %v328 = vld [vmem:[%s276 + $0x198] sm:$0xff]
        %v329 = vld [vmem:[%s276 + $0x1a0] sm:$0xff]
        %v330 = vld [vmem:[%s276 + $0x1a8] sm:$0xff]
        %v331 = vld [vmem:[%s276 + $0x1b0] sm:$0xff]
        %v332 = vld [vmem:[%s276 + $0x1b8] sm:$0xff]
        %v333 = vld [vmem:[%s276 + $0x1c0] sm:$0xff]
        %v334 = vld [vmem:[%s276 + $0x1c8] sm:$0xff]
        %v335 = vld [vmem:[%s276 + $0x1d0] sm:$0xff]
        %v336 = vld [vmem:[%s276 + $0x1d8] sm:$0xff]
        %v337 = vld [vmem:[%s276 + $0x1e0] sm:$0xff]
        %v338 = vld [vmem:[%s276 + $0x1e8] sm:$0xff]
        %v339 = vld [vmem:[%s276 + $0x1f0] sm:$0xff]
        %v340 = vld [vmem:[%s276 + $0x1f8] sm:$0xff]
        %v341 = vld [vmem:[%s276 + $0x200] sm:$0xff]
        %v342 = vld [vmem:[%s276 + $0x208] sm:$0xff]
        %v343 = vld [vmem:[%s276 + $0x210] sm:$0xff]
        %v344 = vld [vmem:[%s276 + $0x218] sm:$0xff]
        %v345 = vld [vmem:[%s276 + $0x220] sm:$0xff]
        %v346 = vld [vmem:[%s276 + $0x228] sm:$0xff]
        %v347 = vld [vmem:[%s276 + $0x230] sm:$0xff]
        %v348 = vld [vmem:[%s276 + $0x238] sm:$0xff]
        %v349 = vld [vmem:[%s3] sm:$0xff]
        %vm350 = vcmask 64512
        %v352 = vsel %vm350, %v277, 0
        %v355 = vsel %vm350, %v278, 0
        %v358 = vsel %vm350, %v279, 0
        %v361 = vsel %vm350, %v280, 0
        %v364 = vsel %vm350, %v281, 0
        %v367 = vsel %vm350, %v282, 0
        %v370 = vsel %vm350, %v283, 0
        %v373 = vsel %vm350, %v284, 0
        %v376 = vsel %vm350, %v285, 0
        %v379 = vsel %vm350, %v286, 0
        %v382 = vsel %vm350, %v287, 0
        %v385 = vsel %vm350, %v288, 0
        %v388 = vsel %vm350, %v289, 0
        %v391 = vsel %vm350, %v290, 0
        %v394 = vsel %vm350, %v291, 0
        %v397 = vsel %vm350, %v292, 0
        %v400 = vsel %vm350, %v293, 0
        %v403 = vsel %vm350, %v294, 0
        %v406 = vsel %vm350, %v295, 0
        %v409 = vsel %vm350, %v296, 0
        %v412 = vsel %vm350, %v297, 0
        %v415 = vsel %vm350, %v298, 0
        %v418 = vsel %vm350, %v299, 0
        %v421 = vsel %vm350, %v300, 0
        %v424 = vsel %vm350, %v301, 0
        %v427 = vsel %vm350, %v302, 0
        %v430 = vsel %vm350, %v303, 0
        %v433 = vsel %vm350, %v304, 0
        %v436 = vsel %vm350, %v305, 0
        %v439 = vsel %vm350, %v306, 0
        %v442 = vsel %vm350, %v307, 0
        %v445 = vsel %vm350, %v308, 0
        %v448 = vsel %vm350, %v309, 0
        %v451 = vsel %vm350, %v310, 0
        %v454 = vsel %vm350, %v311, 0
        %v457 = vsel %vm350, %v312, 0
        %v460 = vsel %vm350, %v313, 0
        %v463 = vsel %vm350, %v314, 0
        %v466 = vsel %vm350, %v315, 0
        %v469 = vsel %vm350, %v316, 0
        %v472 = vsel %vm350, %v317, 0
        %v475 = vsel %vm350, %v318, 0
        %v478 = vsel %vm350, %v319, 0
        %v481 = vsel %vm350, %v320, 0
        %v484 = vsel %vm350, %v321, 0
        %v487 = vsel %vm350, %v322, 0
        %v490 = vsel %vm350, %v323, 0
        %v493 = vsel %vm350, %v324, 0
        %v496 = vsel %vm350, %v325, 0
        %v499 = vsel %vm350, %v326, 0
        %v502 = vsel %vm350, %v327, 0
        %v505 = vsel %vm350, %v328, 0
        %v508 = vsel %vm350, %v329, 0
        %v511 = vsel %vm350, %v330, 0
        %v514 = vsel %vm350, %v331, 0
        %v517 = vsel %vm350, %v332, 0
        %v520 = vsel %vm350, %v333, 0
        %v523 = vsel %vm350, %v334, 0
        %v526 = vsel %vm350, %v335, 0
        %v529 = vsel %vm350, %v336, 0
        %v532 = vsel %vm350, %v337, 0
        %v535 = vsel %vm350, %v338, 0
        %v538 = vsel %vm350, %v339, 0
        %v541 = vsel %vm350, %v340, 0
        %v544 = vsel %vm350, %v341, 0
        %v547 = vsel %vm350, %v342, 0
        %v550 = vsel %vm350, %v343, 0
        %v553 = vsel %vm350, %v344, 0
        %v556 = vsel %vm350, %v345, 0
        %v559 = vsel %vm350, %v346, 0
        %v562 = vsel %vm350, %v347, 0
        %v565 = vsel %vm350, %v348, 0
        %567 = vmatprep.subr.mxu0 0.0
        %568 = vmatpush1.msra.mxu0 %v349
        %569 = vmatprep.subr.mxu0 0.0
        %570 = vmatpush1.msra.mxu0 0.0
        %571 = vmatprep.subr.mxu0 0.0
        %572 = vmatpush1.msra.mxu0 0.0
        %573 = vmatprep.subr.mxu0 0.0
        %574 = vmatpush1.msra.mxu0 0.0
        %575 = vmatprep.subr.mxu0 0.0
        %576 = vmatpush1.msra.mxu0 0.0
        %577 = vmatprep.subr.mxu0 0.0
        %578 = vmatpush1.msra.mxu0 0.0
        %579 = vmatprep.subr.mxu0 0.0
        %580 = vmatpush1.msra.mxu0 0.0
        %581 = vmatprep.subr.mxu0 0.0
        %582 = vmatpush1.msra.mxu0 0.0
        %583 = vmatprep.subr.mxu0 0.0
        %584 = vmatpush1.msra.mxu0 0.0
        %585 = vmatprep.subr.mxu0 0.0
        %586 = vmatpush1.msra.mxu0 0.0
        %587 = vmatprep.subr.mxu0 0.0
        %588 = vmatpush1.msra.mxu0 0.0
        %589 = vmatprep.subr.mxu0 0.0
        %590 = vmatpush1.msra.mxu0 0.0
        %591 = vmatprep.subr.mxu0 0.0
        %592 = vmatpush1.msra.mxu0 0.0
        %593 = vmatprep.subr.mxu0 0.0
        %594 = vmatpush1.msra.mxu0 0.0
        %595 = vmatprep.subr.mxu0 0.0
        %596 = vmatpush1.msra.mxu0 0.0
        %597 = vmatprep.subr.mxu0 0.0
        %598 = vmatpush1.msra.mxu0 0.0
        %599 = vmatprep.subr.mxu0 0.0
        %600 = vmatpush1.msra.mxu0 0.0
        %601 = vmatprep.subr.mxu0 0.0
        %602 = vmatpush1.msra.mxu0 0.0
        %603 = vmatprep.subr.mxu0 0.0
        %604 = vmatpush1.msra.mxu0 0.0
        %605 = vmatprep.subr.mxu0 0.0
        %606 = vmatpush1.msra.mxu0 0.0
        %607 = vmatprep.subr.mxu0 0.0
        %608 = vmatpush1.msra.mxu0 0.0
        %609 = vmatprep.subr.mxu0 0.0
        %610 = vmatpush1.msra.mxu0 0.0
        %611 = vmatprep.subr.mxu0 0.0
        %612 = vmatpush1.msra.mxu0 0.0
        %613 = vmatprep.subr.mxu0 0.0
        %614 = vmatpush1.msra.mxu0 0.0
        %615 = vmatprep.subr.mxu0 0.0
        %616 = vmatpush1.msra.mxu0 0.0
        %617 = vmatprep.subr.mxu0 0.0
        %618 = vmatpush1.msra.mxu0 0.0
        %619 = vmatprep.subr.mxu0 0.0
        %620 = vmatpush1.msra.mxu0 0.0
        %621 = vmatprep.subr.mxu0 0.0
        %622 = vmatpush1.msra.mxu0 0.0
        %623 = vmatprep.subr.mxu0 0.0
        %624 = vmatpush1.msra.mxu0 0.0
        %625 = vmatprep.subr.mxu0 0.0
        %626 = vmatpush1.msra.mxu0 0.0
        %627 = vmatprep.subr.mxu0 0.0
        %628 = vmatpush1.msra.mxu0 0.0
        %629 = vmatprep.subr.mxu0 0.0
        %630 = vmatpush1.msra.mxu0 0.0
        %631 = vmatprep.mubr.f32.mxu0 0.0
        %632 = vmatmul.mubr.f32.gmra.mrb[0].mxu0 %v352
        %v633 = vpop.f32.mrb[0].mxu0
        %v634 = vadd.f32 0.0, %v633
        %v635 = vpop.f32.mrb[0].mxu0
        %636 = vmatprep.mubr.f32.mxu0 0.0
        %637 = vmatmul.mubr.f32.gmra.mrb[0].mxu0 %v355
        %v638 = vpop.f32.mrb[0].mxu0
        %v639 = vadd.f32 0.0, %v638
        %v640 = vpop.f32.mrb[0].mxu0
        %641 = vmatprep.mubr.f32.mxu0 0.0
        %642 = vmatmul.mubr.f32.gmra.mrb[0].mxu0 %v358
        %v643 = vpop.f32.mrb[0].mxu0
        %v644 = vadd.f32 0.0, %v643
        %v645 = vpop.f32.mrb[0].mxu0
        %646 = vmatprep.mubr.f32.mxu0 0.0
        %647 = vmatmul.mubr.f32.gmra.mrb[0].mxu0 %v361
        %v648 = vpop.f32.mrb[0].mxu0
        %v649 = vadd.f32 0.0, %v648
        %v650 = vpop.f32.mrb[0].mxu0
        %651 = vmatprep.mubr.f32.mxu0 0.0
        %652 = vmatmul.mubr.f32.gmra.mrb[0].mxu0 %v364
        %v653 = vpop.f32.mrb[0].mxu0
        %v654 = vadd.f32 0.0, %v653
        %v655 = vpop.f32.mrb[0].mxu0
        %656 = vmatprep.mubr.f32.mxu0 0.0
        %657 = vmatmul.mubr.f32.gmra.mrb[0].mxu0 %v367
        %v658 = vpop.f32.mrb[0].mxu0
        %v659 = vadd.f32 0.0, %v658
        %v660 = vpop.f32.mrb[0].mxu0
        %661 = vmatprep.mubr.f32.mxu0 0.0
        %662 = vmatmul.mubr.f32.gmra.mrb[0].mxu0 %v370
        %v663 = vpop.f32.mrb[0].mxu0
        %v664 = vadd.f32 0.0, %v663
        %v665 = vpop.f32.mrb[0].mxu0
        %666 = vmatprep.mubr.f32.mxu0 0.0
        %667 = vmatmul.mubr.f32.gmra.mrb[0].mxu0 %v373
        %v668 = vpop.f32.mrb[0].mxu0
        %v669 = vadd.f32 0.0, %v668
        %v670 = vpop.f32.mrb[0].mxu0
        %671 = vmatprep.mubr.f32.mxu0 0.0
        %672 = vmatmul.mubr.f32.gmra.mrb[0].mxu0 %v376
        %v673 = vpop.f32.mrb[0].mxu0
        %v674 = vadd.f32 0.0, %v673
        %v675 = vpop.f32.mrb[0].mxu0
        %676 = vmatprep.mubr.f32.mxu0 0.0
        %677 = vmatmul.mubr.f32.gmra.mrb[0].mxu0 %v379
        %v678 = vpop.f32.mrb[0].mxu0
        %v679 = vadd.f32 0.0, %v678
        %v680 = vpop.f32.mrb[0].mxu0
        %681 = vmatprep.mubr.f32.mxu0 0.0
        %682 = vmatmul.mubr.f32.gmra.mrb[0].mxu0 %v382
        %v683 = vpop.f32.mrb[0].mxu0
        %v684 = vadd.f32 0.0, %v683
        %v685 = vpop.f32.mrb[0].mxu0
        %686 = vmatprep.mubr.f32.mxu0 0.0
        %687 = vmatmul.mubr.f32.gmra.mrb[0].mxu0 %v385
        %v688 = vpop.f32.mrb[0].mxu0
        %v689 = vadd.f32 0.0, %v688
        %v690 = vpop.f32.mrb[0].mxu0
        %691 = vmatprep.mubr.f32.mxu0 0.0
        %692 = vmatmul.mubr.f32.gmra.mrb[0].mxu0 %v388
        %v693 = vpop.f32.mrb[0].mxu0
        %v694 = vadd.f32 0.0, %v693
        %v695 = vpop.f32.mrb[0].mxu0
        %696 = vmatprep.mubr.f32.mxu0 0.0
        %697 = vmatmul.mubr.f32.gmra.mrb[0].mxu0 %v391
        %v698 = vpop.f32.mrb[0].mxu0
        %v699 = vadd.f32 0.0, %v698
        %v700 = vpop.f32.mrb[0].mxu0
        %701 = vmatprep.mubr.f32.mxu0 0.0
        %702 = vmatmul.mubr.f32.gmra.mrb[0].mxu0 %v394
        %v703 = vpop.f32.mrb[0].mxu0
        %v704 = vadd.f32 0.0, %v703
        %v705 = vpop.f32.mrb[0].mxu0
        %706 = vmatprep.mubr.f32.mxu0 0.0
        %707 = vmatmul.mubr.f32.gmra.mrb[0].mxu0 %v397
        %v708 = vpop.f32.mrb[0].mxu0
        %v709 = vadd.f32 0.0, %v708
        %v710 = vpop.f32.mrb[0].mxu0
        %711 = vmatprep.mubr.f32.mxu0 0.0
        %712 = vmatmul.mubr.f32.gmra.mrb[0].mxu0 %v400
        %v713 = vpop.f32.mrb[0].mxu0
        %v714 = vadd.f32 0.0, %v713
        %v715 = vpop.f32.mrb[0].mxu0
        %716 = vmatprep.mubr.f32.mxu0 0.0
        %717 = vmatmul.mubr.f32.gmra.mrb[0].mxu0 %v403
        %v718 = vpop.f32.mrb[0].mxu0
        %v719 = vadd.f32 0.0, %v718
        %v720 = vpop.f32.mrb[0].mxu0
        %721 = vmatprep.mubr.f32.mxu0 0.0
        %722 = vmatmul.mubr.f32.gmra.mrb[0].mxu0 %v406
        %v723 = vpop.f32.mrb[0].mxu0
        %v724 = vadd.f32 0.0, %v723
        %v725 = vpop.f32.mrb[0].mxu0
        %726 = vmatprep.mubr.f32.mxu0 0.0
        %727 = vmatmul.mubr.f32.gmra.mrb[0].mxu0 %v409
        %v728 = vpop.f32.mrb[0].mxu0
        %v729 = vpop.f32.mrb[0].mxu0
        %730 = vmatprep.mubr.f32.mxu0 0.0
        %731 = vmatmul.mubr.f32.gmra.mrb[0].mxu0 %v412
        %v732 = vpop.f32.mrb[0].mxu0
        %v733 = vadd.f32 0.0, %v732
        %v734 = vpop.f32.mrb[0].mxu0
        %735 = vmatprep.mubr.f32.mxu0 0.0
        %736 = vmatmul.mubr.f32.gmra.mrb[0].mxu0 %v415
        %v737 = vpop.f32.mrb[0].mxu0
        %v738 = vpop.f32.mrb[0].mxu0
        %739 = vmatprep.mubr.f32.mxu0 0.0
        %740 = vmatmul.mubr.f32.gmra.mrb[0].mxu0 %v418
        %v741 = vpop.f32.mrb[0].mxu0
        %v742 = vadd.f32 0.0, %v741
        %v743 = vpop.f32.mrb[0].mxu0
        %744 = vmatprep.mubr.f32.mxu0 0.0
        %745 = vmatmul.mubr.f32.gmra.mrb[0].mxu0 %v421
        %v746 = vpop.f32.mrb[0].mxu0
        %v747 = vpop.f32.mrb[0].mxu0
        %748 = vmatprep.mubr.f32.mxu0 0.0
        %749 = vmatmul.mubr.f32.gmra.mrb[0].mxu0 %v424
        %v750 = vpop.f32.mrb[0].mxu0
        %v751 = vadd.f32 0.0, %v750
        %v752 = vpop.f32.mrb[0].mxu0
        %753 = vmatprep.mubr.f32.mxu0 0.0
        %754 = vmatmul.mubr.f32.gmra.mrb[0].mxu0 %v427
        %v755 = vpop.f32.mrb[0].mxu0
        %v756 = vpop.f32.mrb[0].mxu0
        %757 = vmatprep.mubr.f32.mxu0 0.0
        %758 = vmatmul.mubr.f32.gmra.mrb[0].mxu0 %v430
        %v759 = vpop.f32.mrb[0].mxu0
        %v760 = vadd.f32 0.0, %v759
        %v761 = vpop.f32.mrb[0].mxu0
        %762 = vmatprep.mubr.f32.mxu0 0.0
        %763 = vmatmul.mubr.f32.gmra.mrb[0].mxu0 %v433
        %v764 = vpop.f32.mrb[0].mxu0
        %v765 = vpop.f32.mrb[0].mxu0
        %766 = vmatprep.mubr.f32.mxu0 0.0
        %767 = vmatmul.mubr.f32.gmra.mrb[0].mxu0 %v436
        %v768 = vpop.f32.mrb[0].mxu0
        %v769 = vadd.f32 0.0, %v768
        %v770 = vpop.f32.mrb[0].mxu0
        %771 = vmatprep.mubr.f32.mxu0 0.0
        %772 = vmatmul.mubr.f32.gmra.mrb[0].mxu0 %v439
        %v773 = vpop.f32.mrb[0].mxu0
        %v774 = vpop.f32.mrb[0].mxu0
        %775 = vmatprep.mubr.f32.mxu0 0.0
        %776 = vmatmul.mubr.f32.gmra.mrb[0].mxu0 %v442
        %v777 = vpop.f32.mrb[0].mxu0
        %v778 = vadd.f32 0.0, %v777
        %v779 = vpop.f32.mrb[0].mxu0
        %780 = vmatprep.mubr.f32.mxu0 0.0
        %781 = vmatmul.mubr.f32.gmra.mrb[0].mxu0 %v445
        %v782 = vpop.f32.mrb[0].mxu0
        %v783 = vpop.f32.mrb[0].mxu0
        %784 = vmatprep.mubr.f32.mxu0 0.0
        %785 = vmatmul.mubr.f32.gmra.mrb[0].mxu0 %v448
        %v786 = vpop.f32.mrb[0].mxu0
        %v787 = vadd.f32 0.0, %v786
        %v788 = vpop.f32.mrb[0].mxu0
        %789 = vmatprep.mubr.f32.mxu0 0.0
        %790 = vmatmul.mubr.f32.gmra.mrb[0].mxu0 %v451
        %v791 = vpop.f32.mrb[0].mxu0
        %v792 = vpop.f32.mrb[0].mxu0
        %793 = vmatprep.mubr.f32.mxu0 0.0
        %794 = vmatmul.mubr.f32.gmra.mrb[0].mxu0 %v454
        %v795 = vpop.f32.mrb[0].mxu0
        %v796 = vadd.f32 0.0, %v795
        %v797 = vpop.f32.mrb[0].mxu0
        %798 = vmatprep.mubr.f32.mxu0 0.0
        %799 = vmatmul.mubr.f32.gmra.mrb[0].mxu0 %v457
        %v800 = vpop.f32.mrb[0].mxu0
        %v801 = vpop.f32.mrb[0].mxu0
        %802 = vmatprep.mubr.f32.mxu0 0.0
        %803 = vmatmul.mubr.f32.gmra.mrb[0].mxu0 %v460
        %v804 = vpop.f32.mrb[0].mxu0
        %v805 = vadd.f32 0.0, %v804
        %v806 = vpop.f32.mrb[0].mxu0
        %807 = vmatprep.mubr.f32.mxu0 0.0
        %808 = vmatmul.mubr.f32.gmra.mrb[0].mxu0 %v463
        %v809 = vpop.f32.mrb[0].mxu0
        %v810 = vadd.f32 0.0, %v809
        %v811 = vpop.f32.mrb[0].mxu0
        %812 = vmatprep.mubr.f32.mxu0 0.0
        %813 = vmatmul.mubr.f32.gmra.mrb[0].mxu0 %v466
        %v814 = vpop.f32.mrb[0].mxu0
        %v815 = vadd.f32 0.0, %v814
        %v816 = vpop.f32.mrb[0].mxu0
        %817 = vmatprep.mubr.f32.mxu0 0.0
        %818 = vmatmul.mubr.f32.gmra.mrb[0].mxu0 %v469
        %v819 = vpop.f32.mrb[0].mxu0
        %v820 = vadd.f32 0.0, %v819
        %v821 = vpop.f32.mrb[0].mxu0
        %822 = vmatprep.mubr.f32.mxu0 0.0
        %823 = vmatmul.mubr.f32.gmra.mrb[0].mxu0 %v472
        %v824 = vpop.f32.mrb[0].mxu0
        %v825 = vadd.f32 0.0, %v824
        %v826 = vpop.f32.mrb[0].mxu0
        %827 = vmatprep.mubr.f32.mxu0 0.0
        %828 = vmatmul.mubr.f32.gmra.mrb[0].mxu0 %v475
        %v829 = vpop.f32.mrb[0].mxu0
        %v830 = vadd.f32 0.0, %v829
        %v831 = vpop.f32.mrb[0].mxu0
        %832 = vmatprep.mubr.f32.mxu0 0.0
        %833 = vmatmul.mubr.f32.gmra.mrb[0].mxu0 %v478
        %v834 = vpop.f32.mrb[0].mxu0
        %v835 = vadd.f32 0.0, %v834
        %v836 = vpop.f32.mrb[0].mxu0
        %837 = vmatprep.mubr.f32.mxu0 0.0
        %838 = vmatmul.mubr.f32.gmra.mrb[0].mxu0 %v481
        %v839 = vpop.f32.mrb[0].mxu0
        %v840 = vadd.f32 0.0, %v839
        %v841 = vpop.f32.mrb[0].mxu0
        %842 = vmatprep.mubr.f32.mxu0 0.0
        %843 = vmatmul.mubr.f32.gmra.mrb[0].mxu0 %v484
        %v844 = vpop.f32.mrb[0].mxu0
        %v845 = vadd.f32 0.0, %v844
        %v846 = vpop.f32.mrb[0].mxu0
        %847 = vmatprep.mubr.f32.mxu0 0.0
        %848 = vmatmul.mubr.f32.gmra.mrb[0].mxu0 %v487
        %v849 = vpop.f32.mrb[0].mxu0
        %v850 = vadd.f32 0.0, %v849
        %v851 = vpop.f32.mrb[0].mxu0
        %852 = vmatprep.mubr.f32.mxu0 0.0
        %853 = vmatmul.mubr.f32.gmra.mrb[0].mxu0 %v490
        %v854 = vpop.f32.mrb[0].mxu0
        %v855 = vadd.f32 0.0, %v854
        %v856 = vpop.f32.mrb[0].mxu0
        %857 = vmatprep.mubr.f32.mxu0 0.0
        %858 = vmatmul.mubr.f32.gmra.mrb[0].mxu0 %v493
        %v859 = vpop.f32.mrb[0].mxu0
        %v860 = vadd.f32 0.0, %v859
        %v861 = vpop.f32.mrb[0].mxu0
        %862 = vmatprep.mubr.f32.mxu0 0.0
        %863 = vmatmul.mubr.f32.gmra.mrb[0].mxu0 %v496
        %v864 = vpop.f32.mrb[0].mxu0
        %v865 = vadd.f32 0.0, %v864
        %v866 = vpop.f32.mrb[0].mxu0
        %867 = vmatprep.mubr.f32.mxu0 0.0
        %868 = vmatmul.mubr.f32.gmra.mrb[0].mxu0 %v499
        %v869 = vpop.f32.mrb[0].mxu0
        %v870 = vadd.f32 0.0, %v869
        %v871 = vpop.f32.mrb[0].mxu0
        %872 = vmatprep.mubr.f32.mxu0 0.0
        %873 = vmatmul.mubr.f32.gmra.mrb[0].mxu0 %v502
        %v874 = vpop.f32.mrb[0].mxu0
        %v875 = vadd.f32 0.0, %v874
        %v876 = vpop.f32.mrb[0].mxu0
        %877 = vmatprep.mubr.f32.mxu0 0.0
        %878 = vmatmul.mubr.f32.gmra.mrb[0].mxu0 %v505
        %v879 = vpop.f32.mrb[0].mxu0
        %v880 = vadd.f32 0.0, %v879
        %v881 = vpop.f32.mrb[0].mxu0
        %882 = vmatprep.mubr.f32.mxu0 0.0
        %883 = vmatmul.mubr.f32.gmra.mrb[0].mxu0 %v508
        %v884 = vpop.f32.mrb[0].mxu0
        %v885 = vpop.f32.mrb[0].mxu0
        %886 = vmatprep.mubr.f32.mxu0 0.0
        %887 = vmatmul.mubr.f32.gmra.mrb[0].mxu0 %v511
        %v888 = vpop.f32.mrb[0].mxu0
        %v889 = vpop.f32.mrb[0].mxu0
        %890 = vmatprep.mubr.f32.mxu0 0.0
        %891 = vmatmul.mubr.f32.gmra.mrb[0].mxu0 %v514
        %v892 = vpop.f32.mrb[0].mxu0
        %v893 = vadd.f32 0.0, %v892
        %v894 = vpop.f32.mrb[0].mxu0
        %895 = vmatprep.mubr.f32.mxu0 0.0
        %896 = vmatmul.mubr.f32.gmra.mrb[0].mxu0 %v517
        %v897 = vpop.f32.mrb[0].mxu0
        %v898 = vpop.f32.mrb[0].mxu0
        %899 = vmatprep.mubr.f32.mxu0 0.0
        %900 = vmatmul.mubr.f32.gmra.mrb[0].mxu0 %v520
        %v901 = vpop.f32.mrb[0].mxu0
        %v902 = vadd.f32 0.0, %v901
        %v903 = vpop.f32.mrb[0].mxu0
        %904 = vmatprep.mubr.f32.mxu0 0.0
        %905 = vmatmul.mubr.f32.gmra.mrb[0].mxu0 %v523
        %v906 = vpop.f32.mrb[0].mxu0
        %v907 = vpop.f32.mrb[0].mxu0
        %908 = vmatprep.mubr.f32.mxu0 0.0
        %909 = vmatmul.mubr.f32.gmra.mrb[0].mxu0 %v526
        %v910 = vpop.f32.mrb[0].mxu0
        %v911 = vadd.f32 0.0, %v910
        %v912 = vpop.f32.mrb[0].mxu0
        %913 = vmatprep.mubr.f32.mxu0 0.0
        %914 = vmatmul.mubr.f32.gmra.mrb[0].mxu0 %v529
        %v915 = vpop.f32.mrb[0].mxu0
        %v916 = vpop.f32.mrb[0].mxu0
        %917 = vmatprep.mubr.f32.mxu0 0.0
        %918 = vmatmul.mubr.f32.gmra.mrb[0].mxu0 %v532
        %v919 = vpop.f32.mrb[0].mxu0
        %v920 = vadd.f32 0.0, %v919
        %v921 = vpop.f32.mrb[0].mxu0
        %922 = vmatprep.mubr.f32.mxu0 0.0
        %923 = vmatmul.mubr.f32.gmra.mrb[0].mxu0 %v535
        %v924 = vpop.f32.mrb[0].mxu0
        %v925 = vpop.f32.mrb[0].mxu0
        %926 = vmatprep.mubr.f32.mxu0 0.0
        %927 = vmatmul.mubr.f32.gmra.mrb[0].mxu0 %v538
        %v928 = vpop.f32.mrb[0].mxu0
        %v929 = vadd.f32 0.0, %v928
        %v930 = vpop.f32.mrb[0].mxu0
        %931 = vmatprep.mubr.f32.mxu0 0.0
        %932 = vmatmul.mubr.f32.gmra.mrb[0].mxu0 %v541
        %v933 = vpop.f32.mrb[0].mxu0
        %v934 = vpop.f32.mrb[0].mxu0
        %935 = vmatprep.mubr.f32.mxu0 0.0
        %936 = vmatmul.mubr.f32.gmra.mrb[0].mxu0 %v544
        %v937 = vpop.f32.mrb[0].mxu0
        %v938 = vadd.f32 0.0, %v937
        %v939 = vpop.f32.mrb[0].mxu0
        %940 = vmatprep.mubr.f32.mxu0 0.0
        %941 = vmatmul.mubr.f32.gmra.mrb[0].mxu0 %v547
        %v942 = vpop.f32.mrb[0].mxu0
        %v943 = vpop.f32.mrb[0].mxu0
        %944 = vmatprep.mubr.f32.mxu0 0.0
        %945 = vmatmul.mubr.f32.gmra.mrb[0].mxu0 %v550
        %v946 = vpop.f32.mrb[0].mxu0
        %v947 = vadd.f32 0.0, %v946
        %v948 = vpop.f32.mrb[0].mxu0
        %949 = vmatprep.mubr.f32.mxu0 0.0
        %950 = vmatmul.mubr.f32.gmra.mrb[0].mxu0 %v553
        %v951 = vpop.f32.mrb[0].mxu0
        %v952 = vpop.f32.mrb[0].mxu0
        %953 = vmatprep.mubr.f32.mxu0 0.0
        %954 = vmatmul.mubr.f32.gmra.mrb[0].mxu0 %v556
        %v955 = vpop.f32.mrb[0].mxu0
        %v956 = vadd.f32 0.0, %v955
        %v957 = vpop.f32.mrb[0].mxu0
        %958 = vmatprep.mubr.f32.mxu0 0.0
        %959 = vmatmul.mubr.f32.gmra.mrb[0].mxu0 %v559
        %v960 = vpop.f32.mrb[0].mxu0
        %v961 = vpop.f32.mrb[0].mxu0
        %962 = vmatprep.mubr.f32.mxu0 0.0
        %963 = vmatmul.mubr.f32.gmra.mrb[0].mxu0 %v562
        %v964 = vpop.f32.mrb[0].mxu0
        %v965 = vpop.f32.mrb[0].mxu0
        %966 = vmatprep.mubr.f32.mxu0 0.0
        %967 = vmatmul.mubr.f32.gmra.mrb[0].mxu0 %v565
        %v968 = vpop.f32.mrb[0].mxu0
        %v969 = vpop.f32.mrb[0].mxu0
        %970 = vdwg.mxu0
        %v971 = vld [vmem:[%s4] sm:$0xff]
        %v972 = vld [vmem:[%s4 + $0x8] sm:$0xff]
        %v973 = vld [vmem:[%s4 + $0x10] sm:$0xff]
        %v974 = vld [vmem:[%s4 + $0x18] sm:$0xff]
        %v975 = vld [vmem:[%s4 + $0x20] sm:$0xff]
        %v976 = vld [vmem:[%s4 + $0x28] sm:$0xff]
        %v977 = vld [vmem:[%s4 + $0x30] sm:$0xff]
        %v978 = vld [vmem:[%s4 + $0x38] sm:$0xff]
        %v979 = vld [vmem:[%s4 + $0x40] sm:$0xff]
        %v980 = vld [vmem:[%s4 + $0x48] sm:$0xff]
        %v981 = vld [vmem:[%s4 + $0x50] sm:$0xff]
        %v982 = vld [vmem:[%s4 + $0x58] sm:$0xff]
        %v983 = vld [vmem:[%s4 + $0x60] sm:$0xff]
        %v984 = vld [vmem:[%s4 + $0x68] sm:$0xff]
        %v985 = vld [vmem:[%s4 + $0x70] sm:$0xff]
        %v986 = vld [vmem:[%s4 + $0x78] sm:$0xff]
        %v987 = vld [vmem:[%s4 + $0x80] sm:$0xff]
        %v988 = vld [vmem:[%s4 + $0x88] sm:$0xff]
        %v989 = vld [vmem:[%s4 + $0x90] sm:$0xff]
        %v990 = vld [vmem:[%s4 + $0xa0] sm:$0xff]
        %v991 = vld [vmem:[%s4 + $0xb0] sm:$0xff]
        %v992 = vld [vmem:[%s4 + $0xc0] sm:$0xff]
        %v993 = vld [vmem:[%s4 + $0xd0] sm:$0xff]
        %v994 = vld [vmem:[%s4 + $0xe0] sm:$0xff]
        %v995 = vld [vmem:[%s4 + $0xf0] sm:$0xff]
        %v996 = vld [vmem:[%s4 + $0x100] sm:$0xff]
        %v997 = vld [vmem:[%s4 + $0x110] sm:$0xff]
        %v998 = vld [vmem:[%s4 + $0x120] sm:$0xff]
        %v999 = vld [vmem:[%s4 + $0x128] sm:$0xff]
        %v1000 = vld [vmem:[%s4 + $0x130] sm:$0xff]
        %v1001 = vld [vmem:[%s4 + $0x138] sm:$0xff]
        %v1002 = vld [vmem:[%s4 + $0x140] sm:$0xff]
        %v1003 = vld [vmem:[%s4 + $0x148] sm:$0xff]
        %v1004 = vld [vmem:[%s4 + $0x150] sm:$0xff]
        %v1005 = vld [vmem:[%s4 + $0x158] sm:$0xff]
        %v1006 = vld [vmem:[%s4 + $0x160] sm:$0xff]
        %v1007 = vld [vmem:[%s4 + $0x168] sm:$0xff]
        %v1008 = vld [vmem:[%s4 + $0x170] sm:$0xff]
        %v1009 = vld [vmem:[%s4 + $0x178] sm:$0xff]
        %v1010 = vld [vmem:[%s4 + $0x180] sm:$0xff]
        %v1011 = vld [vmem:[%s4 + $0x188] sm:$0xff]
        %v1012 = vld [vmem:[%s4 + $0x190] sm:$0xff]
        %v1013 = vld [vmem:[%s4 + $0x198] sm:$0xff]
        %v1014 = vld [vmem:[%s4 + $0x1b0] sm:$0xff]
        %v1015 = vld [vmem:[%s4 + $0x1c0] sm:$0xff]
        %v1016 = vld [vmem:[%s4 + $0x1d0] sm:$0xff]
        %v1017 = vld [vmem:[%s4 + $0x1e0] sm:$0xff]
        %v1018 = vld [vmem:[%s4 + $0x1f0] sm:$0xff]
        %v1019 = vld [vmem:[%s4 + $0x200] sm:$0xff]
        %v1020 = vld [vmem:[%s4 + $0x210] sm:$0xff]
        %v1021 = vld [vmem:[%s4 + $0x220] sm:$0xff]
        %v1022 = vadd.f32 %v634, %v971
        %v1023 = vadd.f32 %v639, %v972
        %v1024 = vadd.f32 %v644, %v973
        %v1025 = vadd.f32 %v649, %v974
        %v1026 = vadd.f32 %v654, %v975
        %v1027 = vadd.f32 %v659, %v976
        %v1028 = vadd.f32 %v664, %v977
        %v1029 = vadd.f32 %v669, %v978
        %v1030 = vadd.f32 %v674, %v979
        %v1031 = vadd.f32 %v679, %v980
        %v1032 = vadd.f32 %v684, %v981
        %v1033 = vadd.f32 %v689, %v982
        %v1034 = vadd.f32 %v694, %v983
        %v1035 = vadd.f32 %v699, %v984
        %v1036 = vadd.f32 %v704, %v985
        %v1037 = vadd.f32 %v709, %v986
        %v1038 = vadd.f32 %v714, %v987
        %v1039 = vadd.f32 %v719, %v988
        %v1040 = vadd.f32 %v724, %v989
        %v1041 = vadd.f32 %v733, %v990
        %v1042 = vadd.f32 %v742, %v991
        %v1043 = vadd.f32 %v751, %v992
        %v1044 = vadd.f32 %v760, %v993
        %v1045 = vadd.f32 %v769, %v994
        %v1046 = vadd.f32 %v778, %v995
        %v1047 = vadd.f32 %v787, %v996
        %v1048 = vadd.f32 %v796, %v997
        %v1049 = vadd.f32 %v805, %v998
        %v1050 = vadd.f32 %v810, %v999
        %v1051 = vadd.f32 %v815, %v1000
        %v1052 = vadd.f32 %v820, %v1001
        %v1053 = vadd.f32 %v825, %v1002
        %v1054 = vadd.f32 %v830, %v1003
        %v1055 = vadd.f32 %v835, %v1004
        %v1056 = vadd.f32 %v840, %v1005
        %v1057 = vadd.f32 %v845, %v1006
        %v1058 = vadd.f32 %v850, %v1007
        %v1059 = vadd.f32 %v855, %v1008
        %v1060 = vadd.f32 %v860, %v1009
        %v1061 = vadd.f32 %v865, %v1010
        %v1062 = vadd.f32 %v870, %v1011
        %v1063 = vadd.f32 %v875, %v1012
        %v1064 = vadd.f32 %v880, %v1013
        %v1065 = vadd.f32 %v893, %v1014
        %v1066 = vadd.f32 %v902, %v1015
        %v1067 = vadd.f32 %v911, %v1016
        %v1068 = vadd.f32 %v920, %v1017
        %v1069 = vadd.f32 %v929, %v1018
        %v1070 = vadd.f32 %v938, %v1019
        %v1071 = vadd.f32 %v947, %v1020
        %v1072 = vadd.f32 %v956, %v1021
        %v1073 = vmax.f32 %v1022, 0.0
        %v1074 = vmax.f32 %v1023, 0.0
        %v1075 = vmax.f32 %v1024, 0.0
        %v1076 = vmax.f32 %v1025, 0.0
        %v1077 = vmax.f32 %v1026, 0.0
        %v1078 = vmax.f32 %v1027, 0.0
        %v1079 = vmax.f32 %v1028, 0.0
        %v1080 = vmax.f32 %v1029, 0.0
        %v1081 = vmax.f32 %v1030, 0.0
        %v1082 = vmax.f32 %v1031, 0.0
        %v1083 = vmax.f32 %v1032, 0.0
        %v1084 = vmax.f32 %v1033, 0.0
        %v1085 = vmax.f32 %v1034, 0.0
        %v1086 = vmax.f32 %v1035, 0.0
        %v1087 = vmax.f32 %v1036, 0.0
        %v1088 = vmax.f32 %v1037, 0.0
        %v1089 = vmax.f32 %v1038, 0.0
        %v1090 = vmax.f32 %v1039, 0.0
        %v1091 = vmax.f32 %v1040, 0.0
        %v1092 = vmax.f32 %v1041, 0.0
        %v1093 = vmax.f32 %v1042, 0.0
        %v1094 = vmax.f32 %v1043, 0.0
        %v1095 = vmax.f32 %v1044, 0.0
        %v1096 = vmax.f32 %v1045, 0.0
        %v1097 = vmax.f32 %v1046, 0.0
        %v1098 = vmax.f32 %v1047, 0.0
        %v1099 = vmax.f32 %v1048, 0.0
        %v1100 = vmax.f32 %v1049, 0.0
        %v1101 = vmax.f32 %v1050, 0.0
        %v1102 = vmax.f32 %v1051, 0.0
        %v1103 = vmax.f32 %v1052, 0.0
        %v1104 = vmax.f32 %v1053, 0.0
        %v1105 = vmax.f32 %v1054, 0.0
        %v1106 = vmax.f32 %v1055, 0.0
        %v1107 = vmax.f32 %v1056, 0.0
        %v1108 = vmax.f32 %v1057, 0.0
        %v1109 = vmax.f32 %v1058, 0.0
        %v1110 = vmax.f32 %v1059, 0.0
        %v1111 = vmax.f32 %v1060, 0.0
        %v1112 = vmax.f32 %v1061, 0.0
        %v1113 = vmax.f32 %v1062, 0.0
        %v1114 = vmax.f32 %v1063, 0.0
        %v1115 = vmax.f32 %v1064, 0.0
        %v1116 = vmax.f32 %v1065, 0.0
        %v1117 = vmax.f32 %v1066, 0.0
        %v1118 = vmax.f32 %v1067, 0.0
        %v1119 = vmax.f32 %v1068, 0.0
        %v1120 = vmax.f32 %v1069, 0.0
        %v1121 = vmax.f32 %v1070, 0.0
        %v1122 = vmax.f32 %v1071, 0.0
        %v1123 = vmax.f32 %v1072, 0.0
        %v1124 = vld [vmem:[%s1] sm:$0xff]
        %v1125 = vld [vmem:[%s1 + $0x8] sm:$0x3]
        %v1126 = vlaneseq
        %v1127 = vshrl.u32 %v1126, 7
        %v1128 = vsub.s32 0, %v1127
        %v1129 = vrot.slane %v1124, %v1128
        %v1130 = vmul.f32 %v277, %v1129
        %v1131 = vmul.f32 %v279, %v1129
        %v1132 = vmul.f32 %v281, %v1129
        %v1133 = vmul.f32 %v283, %v1129
        %v1134 = vmul.f32 %v285, %v1129
        %v1135 = vmul.f32 %v287, %v1129
        %v1136 = vmul.f32 %v289, %v1129
        %v1137 = vmul.f32 %v291, %v1129
        %v1138 = vlaneseq
        %v1139 = vshrl.u32 %v1138, 7
        %v1140 = vsub.s32 1, %v1139
        %v1141 = vrot.slane %v1124, %v1140
        %v1142 = vmul.f32 %v295, %v1141
        %v1143 = vmul.f32 %v297, %v1141
        %v1144 = vmul.f32 %v299, %v1141
        %v1145 = vmul.f32 %v301, %v1141
        %v1146 = vmul.f32 %v303, %v1141
        %v1147 = vmul.f32 %v305, %v1141
        %v1148 = vmul.f32 %v307, %v1141
        %v1149 = vmul.f32 %v309, %v1141
        %v1150 = vadd.f32 %v1130, %v1142
        %v1151 = vadd.f32 %v1131, %v1143
        %v1152 = vadd.f32 %v1132, %v1144
        %v1153 = vadd.f32 %v1133, %v1145
        %v1154 = vadd.f32 %v1134, %v1146
        %v1155 = vadd.f32 %v1135, %v1147
        %v1156 = vadd.f32 %v1136, %v1148
        %v1157 = vadd.f32 %v1137, %v1149
        %v1158 = vlaneseq
        %v1159 = vshrl.u32 %v1158, 7
        %v1160 = vsub.s32 2, %v1159
        %v1161 = vrot.slane %v1124, %v1160
        %v1162 = vmul.f32 %v277, %v1161
        %v1163 = vmul.f32 %v278, %v1161
        %v1164 = vmul.f32 %v279, %v1161
        %v1165 = vmul.f32 %v280, %v1161
        %v1166 = vmul.f32 %v281, %v1161
        %v1167 = vmul.f32 %v282, %v1161
        %v1168 = vmul.f32 %v283, %v1161
        %v1169 = vmul.f32 %v284, %v1161
        %v1170 = vmul.f32 %v285, %v1161
        %v1171 = vmul.f32 %v286, %v1161
        %v1172 = vmul.f32 %v287, %v1161
        %v1173 = vmul.f32 %v288, %v1161
        %v1174 = vmul.f32 %v289, %v1161
        %v1175 = vmul.f32 %v290, %v1161
        %v1176 = vmul.f32 %v291, %v1161
        %v1177 = vmul.f32 %v292, %v1161
        %vm1194 = vcmask 1046528
        %v1195 = vrot.slane %v1162, 1
        %v1196 = vrot.slane %v1163, 1
        %v1197 = vsel %vm1194, %v1195, %v1196
        %v1198 = vrot.slane %v1164, 1
        %v1199 = vrot.slane %v1165, 1
        %v1200 = vsel %vm1194, %v1198, %v1199
        %v1201 = vrot.slane %v1166, 1
        %v1202 = vrot.slane %v1167, 1
        %v1203 = vsel %vm1194, %v1201, %v1202
        %v1204 = vrot.slane %v1168, 1
        %v1205 = vrot.slane %v1169, 1
        %v1206 = vsel %vm1194, %v1204, %v1205
        %v1207 = vrot.slane %v1170, 1
        %v1208 = vrot.slane %v1171, 1
        %v1209 = vsel %vm1194, %v1207, %v1208
        %v1210 = vrot.slane %v1172, 1
        %v1211 = vrot.slane %v1173, 1
        %v1212 = vsel %vm1194, %v1210, %v1211
        %v1213 = vrot.slane %v1174, 1
        %v1214 = vrot.slane %v1175, 1
        %v1215 = vsel %vm1194, %v1213, %v1214
        %v1216 = vrot.slane %v1176, 1
        %v1217 = vrot.slane %v1177, 1
        %v1218 = vsel %vm1194, %v1216, %v1217
        %v1227 = vadd.f32 %v1150, %v1197
        %v1228 = vadd.f32 %v1151, %v1200
        %v1229 = vadd.f32 %v1152, %v1203
        %v1230 = vadd.f32 %v1153, %v1206
        %v1231 = vadd.f32 %v1154, %v1209
        %v1232 = vadd.f32 %v1155, %v1212
        %v1233 = vadd.f32 %v1156, %v1215
        %v1234 = vadd.f32 %v1157, %v1218
        %v1235 = vlaneseq
        %v1236 = vshrl.u32 %v1235, 7
        %v1237 = vsub.s32 3, %v1236
        %v1238 = vrot.slane %v1124, %v1237
        %v1239 = vmul.f32 %v313, %v1238
        %v1240 = vmul.f32 %v315, %v1238
        %v1241 = vmul.f32 %v317, %v1238
        %v1242 = vmul.f32 %v319, %v1238
        %v1243 = vmul.f32 %v321, %v1238
        %v1244 = vmul.f32 %v323, %v1238
        %v1245 = vmul.f32 %v325, %v1238
        %v1246 = vmul.f32 %v327, %v1238
        %v1247 = vadd.f32 %v1227, %v1239
        %v1248 = vadd.f32 %v1228, %v1240
        %v1249 = vadd.f32 %v1229, %v1241
        %v1250 = vadd.f32 %v1230, %v1242
        %v1251 = vadd.f32 %v1231, %v1243
        %v1252 = vadd.f32 %v1232, %v1244
        %v1253 = vadd.f32 %v1233, %v1245
        %v1254 = vadd.f32 %v1234, %v1246
        %v1255 = vlaneseq
        %v1256 = vshrl.u32 %v1255, 7
        %v1257 = vsub.s32 4, %v1256
        %v1258 = vrot.slane %v1124, %v1257
        %v1259 = vmul.f32 %v331, %v1258
        %v1260 = vmul.f32 %v333, %v1258
        %v1261 = vmul.f32 %v335, %v1258
        %v1262 = vmul.f32 %v337, %v1258
        %v1263 = vmul.f32 %v339, %v1258
        %v1264 = vmul.f32 %v341, %v1258
        %v1265 = vmul.f32 %v343, %v1258
        %v1266 = vmul.f32 %v345, %v1258
        %v1267 = vadd.f32 %v1247, %v1259
        %v1268 = vadd.f32 %v1248, %v1260
        %v1269 = vadd.f32 %v1249, %v1261
        %v1270 = vadd.f32 %v1250, %v1262
        %v1271 = vadd.f32 %v1251, %v1263
        %v1272 = vadd.f32 %v1252, %v1264
        %v1273 = vadd.f32 %v1253, %v1265
        %v1274 = vadd.f32 %v1254, %v1266
        %v1275 = vlaneseq
        %v1276 = vshrl.u32 %v1275, 7
        %v1277 = vsub.s32 5, %v1276
        %v1278 = vrot.slane %v1124, %v1277
        %v1279 = vmul.f32 %v313, %v1278
        %v1280 = vmul.f32 %v314, %v1278
        %v1281 = vmul.f32 %v315, %v1278
        %v1282 = vmul.f32 %v316, %v1278
        %v1283 = vmul.f32 %v317, %v1278
        %v1284 = vmul.f32 %v318, %v1278
        %v1285 = vmul.f32 %v319, %v1278
        %v1286 = vmul.f32 %v320, %v1278
        %v1287 = vmul.f32 %v321, %v1278
        %v1288 = vmul.f32 %v322, %v1278
        %v1289 = vmul.f32 %v323, %v1278
        %v1290 = vmul.f32 %v324, %v1278
        %v1291 = vmul.f32 %v325, %v1278
        %v1292 = vmul.f32 %v326, %v1278
        %v1293 = vmul.f32 %v327, %v1278
        %v1294 = vmul.f32 %v328, %v1278
        %v1311 = vrot.slane %v1279, 1
        %v1312 = vrot.slane %v1280, 1
        %v1313 = vsel %vm1194, %v1311, %v1312
        %v1314 = vrot.slane %v1281, 1
        %v1315 = vrot.slane %v1282, 1
        %v1316 = vsel %vm1194, %v1314, %v1315
        %v1317 = vrot.slane %v1283, 1
        %v1318 = vrot.slane %v1284, 1
        %v1319 = vsel %vm1194, %v1317, %v1318
        %v1320 = vrot.slane %v1285, 1
        %v1321 = vrot.slane %v1286, 1
        %v1322 = vsel %vm1194, %v1320, %v1321
        %v1323 = vrot.slane %v1287, 1
        %v1324 = vrot.slane %v1288, 1
        %v1325 = vsel %vm1194, %v1323, %v1324
        %v1326 = vrot.slane %v1289, 1
        %v1327 = vrot.slane %v1290, 1
        %v1328 = vsel %vm1194, %v1326, %v1327
        %v1329 = vrot.slane %v1291, 1
        %v1330 = vrot.slane %v1292, 1
        %v1331 = vsel %vm1194, %v1329, %v1330
        %v1332 = vrot.slane %v1293, 1
        %v1333 = vrot.slane %v1294, 1
        %v1334 = vsel %vm1194, %v1332, %v1333
        %v1343 = vadd.f32 %v1267, %v1313
        %v1344 = vadd.f32 %v1268, %v1316
        %v1345 = vadd.f32 %v1269, %v1319
        %v1346 = vadd.f32 %v1270, %v1322
        %v1347 = vadd.f32 %v1271, %v1325
        %v1348 = vadd.f32 %v1272, %v1328
        %v1349 = vadd.f32 %v1273, %v1331
        %v1350 = vadd.f32 %v1274, %v1334
        %v1351 = vlaneseq
        %v1352 = vshrl.u32 %v1351, 7
        %v1353 = vsub.s32 6, %v1352
        %v1354 = vrot.slane %v1124, %v1353
        %v1355 = vmul.f32 %v279, %v1354
        %v1356 = vmul.f32 %v281, %v1354
        %v1357 = vmul.f32 %v283, %v1354
        %v1358 = vmul.f32 %v285, %v1354
        %v1359 = vmul.f32 %v287, %v1354
        %v1360 = vmul.f32 %v289, %v1354
        %v1361 = vmul.f32 %v291, %v1354
        %v1362 = vmul.f32 %v293, %v1354
        %v1363 = vadd.f32 %v1343, %v1355
        %v1364 = vadd.f32 %v1344, %v1356
        %v1365 = vadd.f32 %v1345, %v1357
        %v1366 = vadd.f32 %v1346, %v1358
        %v1367 = vadd.f32 %v1347, %v1359
        %v1368 = vadd.f32 %v1348, %v1360
        %v1369 = vadd.f32 %v1349, %v1361
        %v1370 = vadd.f32 %v1350, %v1362
        %v1371 = vlaneseq
        %v1372 = vshrl.u32 %v1371, 7
        %v1373 = vsub.s32 7, %v1372
        %v1374 = vrot.slane %v1124, %v1373
        %v1375 = vmul.f32 %v297, %v1374
        %v1376 = vmul.f32 %v299, %v1374
        %v1377 = vmul.f32 %v301, %v1374
        %v1378 = vmul.f32 %v303, %v1374
        %v1379 = vmul.f32 %v305, %v1374
        %v1380 = vmul.f32 %v307, %v1374
        %v1381 = vmul.f32 %v309, %v1374
        %v1382 = vmul.f32 %v311, %v1374
        %v1383 = vadd.f32 %v1363, %v1375
        %v1384 = vadd.f32 %v1364, %v1376
        %v1385 = vadd.f32 %v1365, %v1377
        %v1386 = vadd.f32 %v1366, %v1378
        %v1387 = vadd.f32 %v1367, %v1379
        %v1388 = vadd.f32 %v1368, %v1380
        %v1389 = vadd.f32 %v1369, %v1381
        %v1390 = vadd.f32 %v1370, %v1382
        %v1391 = vlaneseq
        %v1392 = vshrl.u32 %v1391, 7
        %v1393 = vsub.s32 0, %v1392
        %v1394 = vrot.slane %v1125, %v1393
        %v1395 = vmul.f32 %v279, %v1394
        %v1396 = vmul.f32 %v280, %v1394
        %v1397 = vmul.f32 %v281, %v1394
        %v1398 = vmul.f32 %v282, %v1394
        %v1399 = vmul.f32 %v283, %v1394
        %v1400 = vmul.f32 %v284, %v1394
        %v1401 = vmul.f32 %v285, %v1394
        %v1402 = vmul.f32 %v286, %v1394
        %v1403 = vmul.f32 %v287, %v1394
        %v1404 = vmul.f32 %v288, %v1394
        %v1405 = vmul.f32 %v289, %v1394
        %v1406 = vmul.f32 %v290, %v1394
        %v1407 = vmul.f32 %v291, %v1394
        %v1408 = vmul.f32 %v292, %v1394
        %v1409 = vmul.f32 %v293, %v1394
        %v1410 = vmul.f32 %v294, %v1394
        %v1427 = vrot.slane %v1395, 1
        %v1428 = vrot.slane %v1396, 1
        %v1429 = vsel %vm1194, %v1427, %v1428
        %v1430 = vrot.slane %v1397, 1
        %v1431 = vrot.slane %v1398, 1
        %v1432 = vsel %vm1194, %v1430, %v1431
        %v1433 = vrot.slane %v1399, 1
        %v1434 = vrot.slane %v1400, 1
        %v1435 = vsel %vm1194, %v1433, %v1434
        %v1436 = vrot.slane %v1401, 1
        %v1437 = vrot.slane %v1402, 1
        %v1438 = vsel %vm1194, %v1436, %v1437
        %v1439 = vrot.slane %v1403, 1
        %v1440 = vrot.slane %v1404, 1
        %v1441 = vsel %vm1194, %v1439, %v1440
        %v1442 = vrot.slane %v1405, 1
        %v1443 = vrot.slane %v1406, 1
        %v1444 = vsel %vm1194, %v1442, %v1443
        %v1445 = vrot.slane %v1407, 1
        %v1446 = vrot.slane %v1408, 1
        %v1447 = vsel %vm1194, %v1445, %v1446
        %v1448 = vrot.slane %v1409, 1
        %v1449 = vrot.slane %v1410, 1
        %v1450 = vsel %vm1194, %v1448, %v1449
        %v1459 = vadd.f32 %v1383, %v1429
        %v1460 = vadd.f32 %v1384, %v1432
        %v1461 = vadd.f32 %v1385, %v1435
        %v1462 = vadd.f32 %v1386, %v1438
        %v1463 = vadd.f32 %v1387, %v1441
        %v1464 = vadd.f32 %v1388, %v1444
        %v1465 = vadd.f32 %v1389, %v1447
        %v1466 = vadd.f32 %v1390, %v1450
        %v1467 = vlaneseq
        %v1468 = vshrl.u32 %v1467, 7
        %v1469 = vsub.s32 1, %v1468
        %v1470 = vrot.slane %v1125, %v1469
        %v1471 = vadd.f32 %v1459, %v1470
        %v1472 = vadd.f32 %v1460, %v1470
        %v1473 = vadd.f32 %v1461, %v1470
        %v1474 = vadd.f32 %v1462, %v1470
        %v1475 = vadd.f32 %v1463, %v1470
        %v1476 = vadd.f32 %v1464, %v1470
        %v1477 = vadd.f32 %v1465, %v1470
        %v1478 = vadd.f32 %v1466, %v1470
        %v1479 = vld [vmem:[%s2] sm:$0xff]
        %v1480 = vld [vmem:[%s2 + $0x8] sm:$0x3]
        %v1481 = vlaneseq
        %v1482 = vshrl.u32 %v1481, 7
        %v1483 = vsub.s32 0, %v1482
        %v1484 = vrot.slane %v1479, %v1483
        %v1485 = vmul.f32 %v1073, %v1484
        %v1486 = vmul.f32 %v1075, %v1484
        %v1487 = vmul.f32 %v1077, %v1484
        %v1488 = vmul.f32 %v1079, %v1484
        %v1489 = vmul.f32 %v1081, %v1484
        %v1490 = vmul.f32 %v1083, %v1484
        %v1491 = vmul.f32 %v1085, %v1484
        %v1492 = vmul.f32 %v1087, %v1484
        %v1493 = vlaneseq
        %v1494 = vshrl.u32 %v1493, 7
        %v1495 = vsub.s32 1, %v1494
        %v1496 = vrot.slane %v1479, %v1495
        %v1497 = vmul.f32 %v1091, %v1496
        %v1498 = vmul.f32 %v1092, %v1496
        %v1499 = vmul.f32 %v1093, %v1496
        %v1500 = vmul.f32 %v1094, %v1496
        %v1501 = vmul.f32 %v1095, %v1496
        %v1502 = vmul.f32 %v1096, %v1496
        %v1503 = vmul.f32 %v1097, %v1496
        %v1504 = vmul.f32 %v1098, %v1496
        %v1505 = vadd.f32 %v1485, %v1497
        %v1506 = vadd.f32 %v1486, %v1498
        %v1507 = vadd.f32 %v1487, %v1499
        %v1508 = vadd.f32 %v1488, %v1500
        %v1509 = vadd.f32 %v1489, %v1501
        %v1510 = vadd.f32 %v1490, %v1502
        %v1511 = vadd.f32 %v1491, %v1503
        %v1512 = vadd.f32 %v1492, %v1504
        %v1513 = vlaneseq
        %v1514 = vshrl.u32 %v1513, 7
        %v1515 = vsub.s32 2, %v1514
        %v1516 = vrot.slane %v1479, %v1515
        %v1517 = vmul.f32 %v1073, %v1516
        %v1518 = vmul.f32 %v1074, %v1516
        %v1519 = vmul.f32 %v1075, %v1516
        %v1520 = vmul.f32 %v1076, %v1516
        %v1521 = vmul.f32 %v1077, %v1516
        %v1522 = vmul.f32 %v1078, %v1516
        %v1523 = vmul.f32 %v1079, %v1516
        %v1524 = vmul.f32 %v1080, %v1516
        %v1525 = vmul.f32 %v1081, %v1516
        %v1526 = vmul.f32 %v1082, %v1516
        %v1527 = vmul.f32 %v1083, %v1516
        %v1528 = vmul.f32 %v1084, %v1516
        %v1529 = vmul.f32 %v1085, %v1516
        %v1530 = vmul.f32 %v1086, %v1516
        %v1531 = vmul.f32 %v1087, %v1516
        %v1532 = vmul.f32 %v1088, %v1516
        %v1549 = vrot.slane %v1517, 1
        %v1550 = vrot.slane %v1518, 1
        %v1551 = vsel %vm1194, %v1549, %v1550
        %v1552 = vrot.slane %v1519, 1
        %v1553 = vrot.slane %v1520, 1
        %v1554 = vsel %vm1194, %v1552, %v1553
        %v1555 = vrot.slane %v1521, 1
        %v1556 = vrot.slane %v1522, 1
        %v1557 = vsel %vm1194, %v1555, %v1556
        %v1558 = vrot.slane %v1523, 1
        %v1559 = vrot.slane %v1524, 1
        %v1560 = vsel %vm1194, %v1558, %v1559
        %v1561 = vrot.slane %v1525, 1
        %v1562 = vrot.slane %v1526, 1
        %v1563 = vsel %vm1194, %v1561, %v1562
        %v1564 = vrot.slane %v1527, 1
        %v1565 = vrot.slane %v1528, 1
        %v1566 = vsel %vm1194, %v1564, %v1565
        %v1567 = vrot.slane %v1529, 1
        %v1568 = vrot.slane %v1530, 1
        %v1569 = vsel %vm1194, %v1567, %v1568
        %v1570 = vrot.slane %v1531, 1
        %v1571 = vrot.slane %v1532, 1
        %v1572 = vsel %vm1194, %v1570, %v1571
        %v1581 = vadd.f32 %v1505, %v1551
        %v1582 = vadd.f32 %v1506, %v1554
        %v1583 = vadd.f32 %v1507, %v1557
        %v1584 = vadd.f32 %v1508, %v1560
        %v1585 = vadd.f32 %v1509, %v1563
        %v1586 = vadd.f32 %v1510, %v1566
        %v1587 = vadd.f32 %v1511, %v1569
        %v1588 = vadd.f32 %v1512, %v1572
        %v1589 = vlaneseq
        %v1590 = vshrl.u32 %v1589, 7
        %v1591 = vsub.s32 3, %v1590
        %v1592 = vrot.slane %v1479, %v1591
        %v1593 = vmul.f32 %v1100, %v1592
        %v1594 = vmul.f32 %v1102, %v1592
        %v1595 = vmul.f32 %v1104, %v1592
        %v1596 = vmul.f32 %v1106, %v1592
        %v1597 = vmul.f32 %v1108, %v1592
        %v1598 = vmul.f32 %v1110, %v1592
        %v1599 = vmul.f32 %v1112, %v1592
        %v1600 = vmul.f32 %v1114, %v1592
        %v1601 = vadd.f32 %v1581, %v1593
        %v1602 = vadd.f32 %v1582, %v1594
        %v1603 = vadd.f32 %v1583, %v1595
        %v1604 = vadd.f32 %v1584, %v1596
        %v1605 = vadd.f32 %v1585, %v1597
        %v1606 = vadd.f32 %v1586, %v1598
        %v1607 = vadd.f32 %v1587, %v1599
        %v1608 = vadd.f32 %v1588, %v1600
        %v1609 = vlaneseq
        %v1610 = vshrl.u32 %v1609, 7
        %v1611 = vsub.s32 4, %v1610
        %v1612 = vrot.slane %v1479, %v1611
        %v1613 = vmul.f32 %v1116, %v1612
        %v1614 = vmul.f32 %v1117, %v1612
        %v1615 = vmul.f32 %v1118, %v1612
        %v1616 = vmul.f32 %v1119, %v1612
        %v1617 = vmul.f32 %v1120, %v1612
        %v1618 = vmul.f32 %v1121, %v1612
        %v1619 = vmul.f32 %v1122, %v1612
        %v1620 = vmul.f32 %v1123, %v1612
        %v1621 = vadd.f32 %v1601, %v1613
        %v1622 = vadd.f32 %v1602, %v1614
        %v1623 = vadd.f32 %v1603, %v1615
        %v1624 = vadd.f32 %v1604, %v1616
        %v1625 = vadd.f32 %v1605, %v1617
        %v1626 = vadd.f32 %v1606, %v1618
        %v1627 = vadd.f32 %v1607, %v1619
        %v1628 = vadd.f32 %v1608, %v1620
        %v1629 = vlaneseq
        %v1630 = vshrl.u32 %v1629, 7
        %v1631 = vsub.s32 5, %v1630
        %v1632 = vrot.slane %v1479, %v1631
        %v1633 = vmul.f32 %v1100, %v1632
        %v1634 = vmul.f32 %v1101, %v1632
        %v1635 = vmul.f32 %v1102, %v1632
        %v1636 = vmul.f32 %v1103, %v1632
        %v1637 = vmul.f32 %v1104, %v1632
        %v1638 = vmul.f32 %v1105, %v1632
        %v1639 = vmul.f32 %v1106, %v1632
        %v1640 = vmul.f32 %v1107, %v1632
        %v1641 = vmul.f32 %v1108, %v1632
        %v1642 = vmul.f32 %v1109, %v1632
        %v1643 = vmul.f32 %v1110, %v1632
        %v1644 = vmul.f32 %v1111, %v1632
        %v1645 = vmul.f32 %v1112, %v1632
        %v1646 = vmul.f32 %v1113, %v1632
        %v1647 = vmul.f32 %v1114, %v1632
        %v1648 = vmul.f32 %v1115, %v1632
        %v1665 = vrot.slane %v1633, 1
        %v1666 = vrot.slane %v1634, 1
        %v1667 = vsel %vm1194, %v1665, %v1666
        %v1668 = vrot.slane %v1635, 1
        %v1669 = vrot.slane %v1636, 1
        %v1670 = vsel %vm1194, %v1668, %v1669
        %v1671 = vrot.slane %v1637, 1
        %v1672 = vrot.slane %v1638, 1
        %v1673 = vsel %vm1194, %v1671, %v1672
        %v1674 = vrot.slane %v1639, 1
        %v1675 = vrot.slane %v1640, 1
        %v1676 = vsel %vm1194, %v1674, %v1675
        %v1677 = vrot.slane %v1641, 1
        %v1678 = vrot.slane %v1642, 1
        %v1679 = vsel %vm1194, %v1677, %v1678
        %v1680 = vrot.slane %v1643, 1
        %v1681 = vrot.slane %v1644, 1
        %v1682 = vsel %vm1194, %v1680, %v1681
        %v1683 = vrot.slane %v1645, 1
        %v1684 = vrot.slane %v1646, 1
        %v1685 = vsel %vm1194, %v1683, %v1684
        %v1686 = vrot.slane %v1647, 1
        %v1687 = vrot.slane %v1648, 1
        %v1688 = vsel %vm1194, %v1686, %v1687
        %v1697 = vadd.f32 %v1621, %v1667
        %v1698 = vadd.f32 %v1622, %v1670
        %v1699 = vadd.f32 %v1623, %v1673
        %v1700 = vadd.f32 %v1624, %v1676
        %v1701 = vadd.f32 %v1625, %v1679
        %v1702 = vadd.f32 %v1626, %v1682
        %v1703 = vadd.f32 %v1627, %v1685
        %v1704 = vadd.f32 %v1628, %v1688
        %v1705 = vlaneseq
        %v1706 = vshrl.u32 %v1705, 7
        %v1707 = vsub.s32 6, %v1706
        %v1708 = vrot.slane %v1479, %v1707
        %v1709 = vmul.f32 %v1075, %v1708
        %v1710 = vmul.f32 %v1077, %v1708
        %v1711 = vmul.f32 %v1079, %v1708
        %v1712 = vmul.f32 %v1081, %v1708
        %v1713 = vmul.f32 %v1083, %v1708
        %v1714 = vmul.f32 %v1085, %v1708
        %v1715 = vmul.f32 %v1087, %v1708
        %v1716 = vmul.f32 %v1089, %v1708
        %v1717 = vadd.f32 %v1697, %v1709
        %v1718 = vadd.f32 %v1698, %v1710
        %v1719 = vadd.f32 %v1699, %v1711
        %v1720 = vadd.f32 %v1700, %v1712
        %v1721 = vadd.f32 %v1701, %v1713
        %v1722 = vadd.f32 %v1702, %v1714
        %v1723 = vadd.f32 %v1703, %v1715
        %v1724 = vadd.f32 %v1704, %v1716
        %v1725 = vlaneseq
        %v1726 = vshrl.u32 %v1725, 7
        %v1727 = vsub.s32 7, %v1726
        %v1728 = vrot.slane %v1479, %v1727
        %v1729 = vmul.f32 %v1092, %v1728
        %v1730 = vmul.f32 %v1093, %v1728
        %v1731 = vmul.f32 %v1094, %v1728
        %v1732 = vmul.f32 %v1095, %v1728
        %v1733 = vmul.f32 %v1096, %v1728
        %v1734 = vmul.f32 %v1097, %v1728
        %v1735 = vmul.f32 %v1098, %v1728
        %v1736 = vmul.f32 %v1099, %v1728
        %v1737 = vadd.f32 %v1717, %v1729
        %v1738 = vadd.f32 %v1718, %v1730
        %v1739 = vadd.f32 %v1719, %v1731
        %v1740 = vadd.f32 %v1720, %v1732
        %v1741 = vadd.f32 %v1721, %v1733
        %v1742 = vadd.f32 %v1722, %v1734
        %v1743 = vadd.f32 %v1723, %v1735
        %v1744 = vadd.f32 %v1724, %v1736
        %v1745 = vlaneseq
        %v1746 = vshrl.u32 %v1745, 7
        %v1747 = vsub.s32 0, %v1746
        %v1748 = vrot.slane %v1480, %v1747
        %v1749 = vmul.f32 %v1075, %v1748
        %v1750 = vmul.f32 %v1076, %v1748
        %v1751 = vmul.f32 %v1077, %v1748
        %v1752 = vmul.f32 %v1078, %v1748
        %v1753 = vmul.f32 %v1079, %v1748
        %v1754 = vmul.f32 %v1080, %v1748
        %v1755 = vmul.f32 %v1081, %v1748
        %v1756 = vmul.f32 %v1082, %v1748
        %v1757 = vmul.f32 %v1083, %v1748
        %v1758 = vmul.f32 %v1084, %v1748
        %v1759 = vmul.f32 %v1085, %v1748
        %v1760 = vmul.f32 %v1086, %v1748
        %v1761 = vmul.f32 %v1087, %v1748
        %v1762 = vmul.f32 %v1088, %v1748
        %v1763 = vmul.f32 %v1089, %v1748
        %v1764 = vmul.f32 %v1090, %v1748
        %v1781 = vrot.slane %v1749, 1
        %v1782 = vrot.slane %v1750, 1
        %v1783 = vsel %vm1194, %v1781, %v1782
        %v1784 = vrot.slane %v1751, 1
        %v1785 = vrot.slane %v1752, 1
        %v1786 = vsel %vm1194, %v1784, %v1785
        %v1787 = vrot.slane %v1753, 1
        %v1788 = vrot.slane %v1754, 1
        %v1789 = vsel %vm1194, %v1787, %v1788
        %v1790 = vrot.slane %v1755, 1
        %v1791 = vrot.slane %v1756, 1
        %v1792 = vsel %vm1194, %v1790, %v1791
        %v1793 = vrot.slane %v1757, 1
        %v1794 = vrot.slane %v1758, 1
        %v1795 = vsel %vm1194, %v1793, %v1794
        %v1796 = vrot.slane %v1759, 1
        %v1797 = vrot.slane %v1760, 1
        %v1798 = vsel %vm1194, %v1796, %v1797
        %v1799 = vrot.slane %v1761, 1
        %v1800 = vrot.slane %v1762, 1
        %v1801 = vsel %vm1194, %v1799, %v1800
        %v1802 = vrot.slane %v1763, 1
        %v1803 = vrot.slane %v1764, 1
        %v1804 = vsel %vm1194, %v1802, %v1803
        %v1813 = vadd.f32 %v1737, %v1783
        %v1814 = vadd.f32 %v1738, %v1786
        %v1815 = vadd.f32 %v1739, %v1789
        %v1816 = vadd.f32 %v1740, %v1792
        %v1817 = vadd.f32 %v1741, %v1795
        %v1818 = vadd.f32 %v1742, %v1798
        %v1819 = vadd.f32 %v1743, %v1801
        %v1820 = vadd.f32 %v1744, %v1804
        %v1821 = vlaneseq
        %v1822 = vshrl.u32 %v1821, 7
        %v1823 = vsub.s32 1, %v1822
        %v1824 = vrot.slane %v1480, %v1823
        %v1825 = vadd.f32 %v1813, %v1824
        %v1826 = vadd.f32 %v1814, %v1824
        %v1827 = vadd.f32 %v1815, %v1824
        %v1828 = vadd.f32 %v1816, %v1824
        %v1829 = vadd.f32 %v1817, %v1824
        %v1830 = vadd.f32 %v1818, %v1824
        %v1831 = vadd.f32 %v1819, %v1824
        %v1832 = vadd.f32 %v1820, %v1824
        %1841 = vrot.lane.b32.xlu0 %v1825, 8
        %v1842 = vpop.permute.xlu0 %1841
        %1843 = vrot.lane.b32.xlu0 %v1826, 8
        %v1844 = vpop.permute.xlu0 %1843
        %1845 = vrot.lane.b32.xlu0 %v1827, 8
        %v1846 = vpop.permute.xlu0 %1845
        %1847 = vrot.lane.b32.xlu0 %v1828, 8
        %v1848 = vpop.permute.xlu0 %1847
        %1849 = vrot.lane.b32.xlu0 %v1829, 8
        %v1850 = vpop.permute.xlu0 %1849
        %1851 = vrot.lane.b32.xlu0 %v1830, 8
        %v1852 = vpop.permute.xlu0 %1851
        %1853 = vrot.lane.b32.xlu0 %v1831, 8
        %v1854 = vpop.permute.xlu0 %1853
        %1855 = vrot.lane.b32.xlu0 %v1832, 8
        %v1856 = vpop.permute.xlu0 %1855
        %v1865 = vsel %vm350, %v1471, %v1842
        %v1866 = vsel %vm350, %v1472, %v1844
        %v1867 = vsel %vm350, %v1473, %v1846
        %v1868 = vsel %vm350, %v1474, %v1848
        %v1869 = vsel %vm350, %v1475, %v1850
        %v1870 = vsel %vm350, %v1476, %v1852
        %v1871 = vsel %vm350, %v1477, %v1854
        %v1872 = vsel %vm350, %v1478, %v1856
        %v1873 = vld [vmem:[%s5] sm:$0xff]
        %v1874 = vld [vmem:[%s5 + $0x8] sm:$0xff]
        %v1875 = vld [vmem:[%s6] sm:$0x1]
        %v1877 = vlaneseq
        %v1878 = vshrl.u32 %v1877, 7
        %v1879 = vsub.s32 0, %v1878
        %v1880 = vrot.slane %v1875, %v1879
        %vm1882 = vcmask 130048
        %v1884 = vsel %vm1882, %v1865, 0
        %v1887 = vsel %vm1882, %v1866, 0
        %v1890 = vsel %vm1882, %v1867, 0
        %v1893 = vsel %vm1882, %v1868, 0
        %v1896 = vsel %vm1882, %v1869, 0
        %v1899 = vsel %vm1882, %v1870, 0
        %v1902 = vsel %vm1882, %v1871, 0
        %v1905 = vsel %vm1882, %v1872, 0
        %1907 = vmatprep.subr.mxu0 0.0
        %1908 = vmatpush1.msra.mxu0 %v1873
        %1909 = vmatprep.subr.mxu0 0.0
        %1910 = vmatpush1.msra.mxu0 %v1874
        %1911 = vmatprep.subr.mxu0 0.0
        %1912 = vmatpush1.msra.mxu0 0.0
        %1913 = vmatprep.subr.mxu0 0.0
        %1914 = vmatpush1.msra.mxu0 0.0
        %1915 = vmatprep.subr.mxu0 0.0
        %1916 = vmatpush1.msra.mxu0 0.0
        %1917 = vmatprep.subr.mxu0 0.0
        %1918 = vmatpush1.msra.mxu0 0.0
        %1919 = vmatprep.subr.mxu0 0.0
        %1920 = vmatpush1.msra.mxu0 0.0
        %1921 = vmatprep.subr.mxu0 0.0
        %1922 = vmatpush1.msra.mxu0 0.0
        %1923 = vmatprep.subr.mxu0 0.0
        %1924 = vmatpush1.msra.mxu0 0.0
        %1925 = vmatprep.subr.mxu0 0.0
        %1926 = vmatpush1.msra.mxu0 0.0
        %1927 = vmatprep.subr.mxu0 0.0
        %1928 = vmatpush1.msra.mxu0 0.0
        %1929 = vmatprep.subr.mxu0 0.0
        %1930 = vmatpush1.msra.mxu0 0.0
        %1931 = vmatprep.subr.mxu0 0.0
        %1932 = vmatpush1.msra.mxu0 0.0
        %1933 = vmatprep.subr.mxu0 0.0
        %1934 = vmatpush1.msra.mxu0 0.0
        %1935 = vmatprep.subr.mxu0 0.0
        %1936 = vmatpush1.msra.mxu0 0.0
        %1937 = vmatprep.subr.mxu0 0.0
        %1938 = vmatpush1.msra.mxu0 0.0
        %1939 = vmatprep.subr.mxu0 0.0
        %1940 = vmatpush1.msra.mxu0 0.0
        %1941 = vmatprep.subr.mxu0 0.0
        %1942 = vmatpush1.msra.mxu0 0.0
        %1943 = vmatprep.subr.mxu0 0.0
        %1944 = vmatpush1.msra.mxu0 0.0
        %1945 = vmatprep.subr.mxu0 0.0
        %1946 = vmatpush1.msra.mxu0 0.0
        %1947 = vmatprep.subr.mxu0 0.0
        %1948 = vmatpush1.msra.mxu0 0.0
        %1949 = vmatprep.subr.mxu0 0.0
        %1950 = vmatpush1.msra.mxu0 0.0
        %1951 = vmatprep.subr.mxu0 0.0
        %1952 = vmatpush1.msra.mxu0 0.0
        %1953 = vmatprep.subr.mxu0 0.0
        %1954 = vmatpush1.msra.mxu0 0.0
        %1955 = vmatprep.subr.mxu0 0.0
        %1956 = vmatpush1.msra.mxu0 0.0
        %1957 = vmatprep.subr.mxu0 0.0
        %1958 = vmatpush1.msra.mxu0 0.0
        %1959 = vmatprep.subr.mxu0 0.0
        %1960 = vmatpush1.msra.mxu0 0.0
        %1961 = vmatprep.subr.mxu0 0.0
        %1962 = vmatpush1.msra.mxu0 0.0
        %1963 = vmatprep.subr.mxu0 0.0
        %1964 = vmatpush1.msra.mxu0 0.0
        %1965 = vmatprep.subr.mxu0 0.0
        %1966 = vmatpush1.msra.mxu0 0.0
        %1967 = vmatprep.subr.mxu0 0.0
        %1968 = vmatpush1.msra.mxu0 0.0
        %1969 = vmatprep.subr.mxu0 0.0
        %1970 = vmatpush1.msra.mxu0 0.0
        %1971 = vmatprep.mubr.f32.mxu0 0.0
        %1972 = vmatmul.mubr.f32.gmra.mrb[0].mxu0 %v1884
        %v1973 = vpop.f32.mrb[0].mxu0
        %v1974 = vadd.f32 %v1880, %v1973
        %v1975 = vpop.f32.mrb[0].mxu0
        %1976 = vmatprep.mubr.f32.mxu0 0.0
        %1977 = vmatmul.mubr.f32.gmra.mrb[0].mxu0 %v1887
        %v1978 = vpop.f32.mrb[0].mxu0
        %v1979 = vadd.f32 %v1880, %v1978
        %v1980 = vpop.f32.mrb[0].mxu0
        %1981 = vmatprep.mubr.f32.mxu0 0.0
        %1982 = vmatmul.mubr.f32.gmra.mrb[0].mxu0 %v1890
        %v1983 = vpop.f32.mrb[0].mxu0
        %v1984 = vadd.f32 %v1880, %v1983
        %v1985 = vpop.f32.mrb[0].mxu0
        %1986 = vmatprep.mubr.f32.mxu0 0.0
        %1987 = vmatmul.mubr.f32.gmra.mrb[0].mxu0 %v1893
        %v1988 = vpop.f32.mrb[0].mxu0
        %v1989 = vadd.f32 %v1880, %v1988
        %v1990 = vpop.f32.mrb[0].mxu0
        %1991 = vmatprep.mubr.f32.mxu0 0.0
        %1992 = vmatmul.mubr.f32.gmra.mrb[0].mxu0 %v1896
        %v1993 = vpop.f32.mrb[0].mxu0
        %v1994 = vadd.f32 %v1880, %v1993
        %v1995 = vpop.f32.mrb[0].mxu0
        %1996 = vmatprep.mubr.f32.mxu0 0.0
        %1997 = vmatmul.mubr.f32.gmra.mrb[0].mxu0 %v1899
        %v1998 = vpop.f32.mrb[0].mxu0
        %v1999 = vadd.f32 %v1880, %v1998
        %v2000 = vpop.f32.mrb[0].mxu0
        %2001 = vmatprep.mubr.f32.mxu0 0.0
        %2002 = vmatmul.mubr.f32.gmra.mrb[0].mxu0 %v1902
        %v2003 = vpop.f32.mrb[0].mxu0
        %v2004 = vadd.f32 %v1880, %v2003
        %v2005 = vpop.f32.mrb[0].mxu0
        %2006 = vmatprep.mubr.f32.mxu0 0.0
        %2007 = vmatmul.mubr.f32.gmra.mrb[0].mxu0 %v1905
        %v2008 = vpop.f32.mrb[0].mxu0
        %v2009 = vadd.f32 %v1880, %v2008
        %v2010 = vpop.f32.mrb[0].mxu0
        %2011 = vdwg.mxu0
        %v2012 = vmax.f32 %v1974, 0.0
        %v2013 = vmax.f32 %v1979, 0.0
        %v2014 = vmax.f32 %v1984, 0.0
        %v2015 = vmax.f32 %v1989, 0.0
        %v2016 = vmax.f32 %v1994, 0.0
        %v2017 = vmax.f32 %v1999, 0.0
        %v2018 = vmax.f32 %v2004, 0.0
        %v2019 = vmax.f32 %v2009, 0.0
        %2020 = vst.msk [vmem:[%s271] sm:$0xff] %vm1882, %v2012
        %2021 = vst.msk [vmem:[%s271 + $0x8] sm:$0xff] %vm1882, %v2013
        %2022 = vst.msk [vmem:[%s271 + $0x10] sm:$0xff] %vm1882, %v2014
        %2023 = vst.msk [vmem:[%s271 + $0x18] sm:$0xff] %vm1882, %v2015
        %2024 = vst.msk [vmem:[%s271 + $0x20] sm:$0xff] %vm1882, %v2016
        %2025 = vst.msk [vmem:[%s271 + $0x28] sm:$0xff] %vm1882, %v2017
        %2026 = vst.msk [vmem:[%s271 + $0x30] sm:$0xff] %vm1882, %v2018
        %2027 = vst.msk [vmem:[%s271 + $0x38] sm:$0xff] %vm1882, %v2019
        %s2028 = sand.u32 %s181, 1
        %s2029 = scalar_lea.sflag [#allocation3], %s2028
        %s2030 = sand.u32 %s181, 1
        %s2031 = smul.addr %s2030, 64
        %s2032 = scalar_lea.vmem [#allocation2], %s2031
        // Predicated region
        $region49: #{down_block.1} parent=47 // pred_check
          %p2033 = pneg %p191
        $region50: #{down_block.1} parent=47 // pred_check_branch
          %2035 = sbr.rel (%p2033) target = $region52
        $region51: #{down_block.1} parent=47 // pred_region
          %s2037 = ssub.s32 1024, 1024
          %2038 = vsyncadd %s2029, %s2037
          %s2039 = smul.addr %s21, 8
          %s2040 = smul.addr %s2039, 128
          %s2041 = scalar_lea.hbm %s7, %s2040
          %s2042 = sshll.u32 %s2032, 4
          %s2043 = int_to_ptr.vmem [resolvable:$true] %s2042
          %2048 = dma.vmem_to_hbm [thread:$0]  %s2043, 1024, %s2041, %s2029, 128, 128, 8
        $region52: #{down_block.1} parent=47 // pred_fallthru
          _
      $region48: #{down_block.1} parent=5 // pred_fallthru
        _
      %p2049 = scmp.le.s32.totalorder 2, %s16
      // Predicated region
      $region53: #{down_block.1} parent=5 // pred_check
        %p2050 = pneg %p2049
      $region54: #{down_block.1} parent=5 // pred_check_branch
        %2052 = sbr.rel (%p2050) target = $region56
      $region55: #{down_block.1} parent=5 // pred_region
        %s2053 = ssub.s32 %s16, 2
        // Predicated region
        $region57: #{down_block.1} parent=55 // pred_check
          %p2054 = pneg %p197
        $region58: #{down_block.1} parent=55 // pred_check_branch
          %2056 = sbr.rel (%p2054) target = $region60
        $region59: #{down_block.1} parent=55 // pred_region
          %s2057 = sand.u32 %s182, 1
          %s2058 = scalar_lea.sflag [#allocation3], %s2057
          %s2059 = sand.u32 %s182, 1
          %s2060 = smul.addr %s2059, 64
          %s2061 = scalar_lea.vmem [#allocation2], %s2060
          %2062 = dma.done %s2058, 1024
        $region60: #{down_block.1} parent=55 // pred_fallthru
          _
      $region56: #{down_block.1} parent=5 // pred_fallthru
        _
    $region6: #{down_block.1} parent=1 // loop_footer
      %s20 = sadd.s32 1, %s16
    $region7: #{down_block.1} parent=1 // loop_footer_branch
      %15 = sbr.rel target = $region3
    $region8: #{down_block.1} parent=1 // loop_exit
      _
    %2063 = vsyncpa [#allocation3], 1
    %s2064 = scalar_lea.sflag [#allocation3], 1
    %2065 = vsyncpa %s2064, 1

</llo_original>
